<compile_context>
chip_gen: v7x
topology: tpu7x:2x2x1
jax: 0.10.0
libtpu: 0.0.40
codegen_flags: <defaults>
</compile_context>

<pallas_src>
from functools import partial

import jax
import jax.numpy as jnp
from jax.experimental import pallas as pl
from jax.experimental.pallas import tpu as pltpu

_LANE = 128
_SUBLANE = 8
_TARGET_TILE_N = 1024      # big row tile to amortize per-step pipeline overhead
_MIN_PALLAS_ROWS = 128     # below this the plain XLA matmul chain is cheaper


def _round_up(x, m):
    return (x + m - 1) // m * m


def _pick_tile_n(n_rows):
    """Row tile: large (amortize ~0.35 us/step), >= 2 grid steps when possible
    (v7x megacore), never larger than the (sublane-rounded) row count."""
    tile = min(_TARGET_TILE_N, _round_up(n_rows, _LANE))
    if n_rows > _LANE:
        tile = min(tile, _round_up(pl.cdiv(n_rows, 2), _LANE))
    tile = min(tile, _round_up(n_rows, _SUBLANE))
    return max(tile, _SUBLANE)


def _vmem_cap_bytes():
    """Generation-aware scoped-VMEM cap (~80% of physical per-TC VMEM)."""
    try:
        info = pltpu.get_tpu_info()
        cap = getattr(info, "vmem_capacity_bytes", None)
        if cap:
            return int(cap) * 4 // 5      # ~51 MiB on v7x, ~102 MiB on v5e/v6e
    except Exception:
        pass
    return 48 * 1024 * 1024               # conservative fallback, fits all gens


def _mlp_kernel(x_ref, *refs, num_layers, sigmoid_output, compute_dtype):
    """(Linear -> ReLU)^(L-1) -> Linear [-> sigmoid] on one row tile.

    refs = (w0, b0, ..., w_{L-1}, b_{L-1}, o_ref). Matmuls use bf16 MXU inputs
    with f32 accumulation; bias / ReLU / sigmoid epilogues stay in f32.
    """
    o_ref = refs[-1]
    h = x_ref[...].astype(compute_dtype)      # cast in-kernel (no host pad pass)
    y = None
    for i in range(num_layers):
        w_ref = refs[2 * i]
        b_ref = refs[2 * i + 1]
        y = jnp.dot(h, w_ref[...], preferred_element_type=jnp.float32) + b_ref[...]
        if i < num_layers - 1:
            h = jnp.maximum(y, 0.0).astype(compute_dtype)   # ReLU in f32, back to bf16
    if sigmoid_output:
        y = jax.nn.sigmoid(y)                 # f32 transcendental (EUP)
    o_ref[...] = y.astype(o_ref.dtype)


def _xla_forward(x, weights, biases, sigmoid_output):
    """Small-N fallback: fused XLA matmul chain with identical numerics."""
    h = x.astype(weights[0].dtype)
    y = None
    n = len(weights)
    for i, (w, b) in enumerate(zip(weights, biases)):
        y = jnp.dot(h, w, preferred_element_type=jnp.float32) + b
        if i < n - 1:
            h = jnp.maximum(y, 0.0).astype(w.dtype)
    if sigmoid_output:
        y = jax.nn.sigmoid(y)
    return y.astype(x.dtype)


def mlp_pallas_forward(x, weights, biases, *, sigmoid_output,
                       tile_n=None, out_dtype=None,
                       min_pallas_rows=_MIN_PALLAS_ROWS):
    """y = MLP(x). x: (N, d_in) unpadded. weights[i]: (in_i, out_i) with hidden
    dims zero-padded to 128 (exact); first in-dim / last out-dim unpadded."""
    N, d_in = x.shape
    num_layers = len(weights)
    d_out = weights[-1].shape[1]
    compute_dtype = weights[0].dtype
    out_dtype = x.dtype if out_dtype is None else out_dtype

    if N < min_pallas_rows:
        # Fixed launch/pad/slice overheads dominate tiny batches.
        return _xla_forward(x, weights, biases, sigmoid_output).astype(out_dtype)

    if tile_n is None:
        tile_n = _pick_tile_n(N)
    else:
        tile_n = max(_SUBLANE, min(_round_up(tile_n, _SUBLANE), _round_up(N, _SUBLANE)))
    grid = (pl.cdiv(N, tile_n),)

    in_specs = [pl.BlockSpec((tile_n, d_in), lambda i: (i, 0))]
    operands = [x]
    for w, b in zip(weights, biases):
        # Full-block, constant index_map -> DMA'd once, VMEM-resident across grid.
        # TODO(synk): single-buffer resident params (pl.Buffered(1)) once that
        # pipeline_mode is supported on this pallas_call path; halves their VMEM.
        in_specs.append(pl.BlockSpec(w.shape, lambda i: (0, 0)))
        in_specs.append(pl.BlockSpec(b.shape, lambda i: (0, 0)))
        operands.extend([w, b])

    # VMEM budget (generation-aware): double-buffered params + x/out tiles +
    # f32 intermediates, with headroom under ~80% of physical per-TC VMEM.
    param_bytes = (sum(int(w.size) * w.dtype.itemsize for w in weights)
                   + sum(int(b.size) * b.dtype.itemsize for b in biases))
    max_dp = max(max(w.shape[0], w.shape[1]) for w in weights)
    act_bytes = 2 * tile_n * max_dp * (2 + 4)       # bf16 h + f32 y, 2x slack
    io_bytes = (2 * tile_n * d_in * x.dtype.itemsize
                + 2 * tile_n * d_out * jnp.dtype(out_dtype).itemsize)
    est = 2 * param_bytes + act_bytes + io_bytes
    cap = _vmem_cap_bytes()
    vmem_limit = int(min(cap, max(32 * 1024 * 1024, 3 * est // 2)))
    # TODO(synk): tile weights over their output dim if resident params ever
    # exceed the cap (matters first on v7x: 64 MiB/TC, params replicated per TC).
    # TODO(synk): optional fp8 (v7x) / int8 (v6e) weight quantization with
    # per-channel scales in the f32 epilogue for compute/weight-bound sizes.

    flops = 2 * N * sum(w.shape[0] * w.shape[1] for w in weights)
    transcendentals = N * d_out if sigmoid_output else 0
    bytes_accessed = (N * d_in * x.dtype.itemsize + param_bytes
                      + N * d_out * jnp.dtype(out_dtype).itemsize)

    kernel = partial(_mlp_kernel, num_layers=num_layers,
                     sigmoid_output=sigmoid_output, compute_dtype=compute_dtype)

    return pl.pallas_call(
        kernel,
        out_shape=jax.ShapeDtypeStruct((N, d_out), out_dtype),
        grid=grid,
        in_specs=in_specs,
        out_specs=pl.BlockSpec((tile_n, d_out), lambda i: (i, 0)),
        compiler_params=pltpu.CompilerParams(
            dimension_semantics=("parallel",),
            vmem_limit_bytes=vmem_limit,
        ),
        cost_estimate=pl.CostEstimate(
            flops=int(flops),
            transcendentals=int(transcendentals),
            bytes_accessed=int(bytes_accessed),
        ),
    )(*operands)


class MLPPallas:
    """JAX/Pallas equivalent of the PyTorch MLP module (sam2/hiera.py)."""

    def __init__(self, input_dim, hidden_dim, output_dim, num_layers,
                 sigmoid_output=False, key=None,
                 param_dtype=jnp.float32, compute_dtype=jnp.bfloat16,
                 tile_n=None):
        self.num_layers = num_layers
        self.output_dim = output_dim
        self.sigmoid_output = sigmoid_output
        self.tile_n = tile_n

        h = [hidden_dim] * (num_layers - 1)
        dims = list(zip([input_dim] + h, h + [output_dim]))
        if key is None:
            key = jax.random.PRNGKey(0)

        self.weights_f32 = []   # unpadded f32 params (reference / export)
        self.biases_f32 = []
        self.weights = []       # bf16, hidden dims zero-padded to 128 (exact)
        self.biases = []        # f32, shape (1, out_p)
        for li, (n_in, n_out) in enumerate(dims):
            key, kw, kb = jax.random.split(key, 3)
            bound = 1.0 / (n_in ** 0.5)
            # PyTorch default nn.Linear init: U(-1/sqrt(fan_in), 1/sqrt(fan_in))
            w = jax.random.uniform(kw, (n_in, n_out), param_dtype, -bound, bound)
            b = jax.random.uniform(kb, (n_out,), param_dtype, -bound, bound)
            self.weights_f32.append(w)
            self.biases_f32.append(b)

            in_p = n_in if li == 0 else _round_up(n_in, _LANE)
            out_p = n_out if li == num_layers - 1 else _round_up(n_out, _LANE)
            w_p = jnp.zeros((in_p, out_p), param_dtype).at[:n_in, :n_out].set(w)
            b_p = jnp.zeros((1, out_p), jnp.float32).at[0, :n_out].set(
                b.astype(jnp.float32))
            self.weights.append(w_p.astype(compute_dtype))
            self.biases.append(b_p)

    def __call__(self, x):
        lead = x.shape[:-1]
        x2 = x.reshape(-1, x.shape[-1])
        out = mlp_pallas_forward(
            x2, self.weights, self.biases,
            sigmoid_output=self.sigmoid_output, tile_n=self.tile_n)
        return out.reshape(*lead, self.output_dim)


def _reference_forward_f32(mlp, x):
    # Module semantics in pure f32 (matches the PyTorch module).
    h = x
    for i, (w, b) in enumerate(zip(mlp.weights_f32, mlp.biases_f32)):
        h = h @ w + b
        if i < mlp.num_layers - 1:
            h = jnp.maximum(h, 0.0)
    if mlp.sigmoid_output:
        h = jax.nn.sigmoid(h)
    return h


def _reference_forward_bf16(mlp, x):
    # Mirrors kernel numerics: bf16 MXU inputs, f32 accumulation/epilogue.
    h = x.astype(jnp.bfloat16)
    y = None
    for i, (w, b) in enumerate(zip(mlp.weights_f32, mlp.biases_f32)):
        y = jnp.dot(h, w.astype(jnp.bfloat16),
                    preferred_element_type=jnp.float32) + b.astype(jnp.float32)
        if i < mlp.num_layers - 1:
            h = jnp.maximum(y, 0.0).astype(jnp.bfloat16)
    if mlp.sigmoid_output:
        y = jax.nn.sigmoid(y)
    return y.astype(x.dtype)


if __name__ == "__main__":
    key = jax.random.PRNGKey(0)
    k_x, k_p = jax.random.split(key)

    # Small shapes consistent with the module; N=288 exercises the Pallas path
    # with a 2-step grid (tile 256) including a ragged (masked) last row tile.
    N, input_dim, hidden_dim, output_dim, num_layers = 288, 32, 64, 16, 3
    x = jax.random.normal(k_x, (N, input_dim), jnp.float32)

    mlp = MLPPallas(input_dim, hidden_dim, output_dim, num_layers,
                    sigmoid_output=True, key=k_p)

    out = jax.block_until_ready(mlp(x))
    assert out.shape == (N, output_dim)
    assert bool(jnp.all(jnp.isfinite(out)))

    # Tight check against a pure-JAX reference with the same bf16/f32 numerics.
    ref_bf16 = _reference_forward_bf16(mlp, x)
    assert jnp.allclose(out, ref_bf16, atol=2e-3, rtol=2e-3), "bf16 ref mismatch"

    # Loose check against full-f32 module semantics (bf16 MXU inputs differ).
    ref_f32 = _reference_forward_f32(mlp, x)
    assert jnp.allclose(out, ref_f32, atol=5e-2, rtol=5e-2), "f32 ref mismatch"

    print("KERNEL_OK")
</pallas_src>

<mosaic_0001>
module attributes {stable_mosaic.version = 11 : i64} {
  func.func @_mlp_kernel(%arg0: i32, %arg1: memref<256x32xf32, #tpu.memory_space<vmem>>, %arg2: memref<32x128xbf16, #tpu.memory_space<vmem>>, %arg3: memref<1x128xf32, #tpu.memory_space<vmem>>, %arg4: memref<128x128xbf16, #tpu.memory_space<vmem>>, %arg5: memref<1x128xf32, #tpu.memory_space<vmem>>, %arg6: memref<128x16xbf16, #tpu.memory_space<vmem>>, %arg7: memref<1x16xf32, #tpu.memory_space<vmem>>, %arg8: memref<256x16xf32, #tpu.memory_space<vmem>>) attributes {dimension_semantics = [#tpu.dimension_semantics<parallel>], iteration_bounds = array<i64: 2>, scalar_prefetch = 0 : i64, scratch_operands = 0 : i64, tpu.core_type = #tpu.core_type<tc>, window_params = [{transform_indices = @transform_0, window_bounds = array<i64: 256, 32>}, {pipeline_mode = #tpu.pipeline_mode<synchronous>, transform_indices = @transform_1, window_bounds = array<i64: 32, 128>}, {pipeline_mode = #tpu.pipeline_mode<synchronous>, transform_indices = @transform_2, window_bounds = array<i64: 1, 128>}, {pipeline_mode = #tpu.pipeline_mode<synchronous>, transform_indices = @transform_3, window_bounds = array<i64: 128, 128>}, {pipeline_mode = #tpu.pipeline_mode<synchronous>, transform_indices = @transform_4, window_bounds = array<i64: 1, 128>}, {pipeline_mode = #tpu.pipeline_mode<synchronous>, transform_indices = @transform_5, window_bounds = array<i64: 128, 16>}, {pipeline_mode = #tpu.pipeline_mode<synchronous>, transform_indices = @transform_6, window_bounds = array<i64: 1, 16>}, {transform_indices = @transform_7, window_bounds = array<i64: 256, 16>}]} {
    %c0 = arith.constant 0 : index
    %c0_0 = arith.constant 0 : index
    %0 = vector.load %arg1[%c0, %c0_0] : memref<256x32xf32, #tpu.memory_space<vmem>>, vector<256x32xf32>
    %1 = arith.truncf %0 : vector<256x32xf32> to vector<256x32xbf16>
    %c0_1 = arith.constant 0 : index
    %c0_2 = arith.constant 0 : index
    %2 = vector.load %arg2[%c0_1, %c0_2] : memref<32x128xbf16, #tpu.memory_space<vmem>>, vector<32x128xbf16>
    %cst = arith.constant dense<0.000000e+00> : vector<256x128xf32>
    %3 = tpu.matmul %1, %2, %cst {dimension_numbers = #tpu.dot_dimension_numbers<[1], [0], [0], [1], [0, 0, 1, 1], [], []>} : vector<256x32xbf16>, vector<32x128xbf16>, vector<256x128xf32> -> vector<256x128xf32>
    %c0_3 = arith.constant 0 : index
    %c0_4 = arith.constant 0 : index
    %4 = vector.load %arg3[%c0_3, %c0_4] : memref<1x128xf32, #tpu.memory_space<vmem>>, vector<1x128xf32>
    %5 = vector.broadcast %4 : vector<1x128xf32> to vector<256x128xf32>
    %6 = arith.addf %3, %5 : vector<256x128xf32>
    %cst_5 = arith.constant 0.000000e+00 : f32
    %7 = vector.broadcast %cst_5 : f32 to vector<256x128xf32>
    %8 = arith.maximumf %6, %7 : vector<256x128xf32>
    %9 = arith.truncf %8 : vector<256x128xf32> to vector<256x128xbf16>
    %c0_6 = arith.constant 0 : index
    %c0_7 = arith.constant 0 : index
    %10 = vector.load %arg4[%c0_6, %c0_7] : memref<128x128xbf16, #tpu.memory_space<vmem>>, vector<128x128xbf16>
    %cst_8 = arith.constant dense<0.000000e+00> : vector<256x128xf32>
    %11 = tpu.matmul %9, %10, %cst_8 {dimension_numbers = #tpu.dot_dimension_numbers<[1], [0], [0], [1], [0, 0, 1, 1], [], []>} : vector<256x128xbf16>, vector<128x128xbf16>, vector<256x128xf32> -> vector<256x128xf32>
    %c0_9 = arith.constant 0 : index
    %c0_10 = arith.constant 0 : index
    %12 = vector.load %arg5[%c0_9, %c0_10] : memref<1x128xf32, #tpu.memory_space<vmem>>, vector<1x128xf32>
    %13 = vector.broadcast %12 : vector<1x128xf32> to vector<256x128xf32>
    %14 = arith.addf %11, %13 : vector<256x128xf32>
    %cst_11 = arith.constant 0.000000e+00 : f32
    %15 = vector.broadcast %cst_11 : f32 to vector<256x128xf32>
    %16 = arith.maximumf %14, %15 : vector<256x128xf32>
    %17 = arith.truncf %16 : vector<256x128xf32> to vector<256x128xbf16>
    %c0_12 = arith.constant 0 : index
    %c0_13 = arith.constant 0 : index
    %18 = vector.load %arg6[%c0_12, %c0_13] : memref<128x16xbf16, #tpu.memory_space<vmem>>, vector<128x16xbf16>
    %cst_14 = arith.constant dense<0.000000e+00> : vector<256x16xf32>
    %19 = tpu.matmul %17, %18, %cst_14 {dimension_numbers = #tpu.dot_dimension_numbers<[1], [0], [0], [1], [0, 0, 1, 1], [], []>} : vector<256x128xbf16>, vector<128x16xbf16>, vector<256x16xf32> -> vector<256x16xf32>
    %c0_15 = arith.constant 0 : index
    %c0_16 = arith.constant 0 : index
    %20 = vector.load %arg7[%c0_15, %c0_16] : memref<1x16xf32, #tpu.memory_space<vmem>>, vector<1x16xf32>
    %21 = vector.broadcast %20 : vector<1x16xf32> to vector<256x16xf32>
    %22 = arith.addf %19, %21 : vector<256x16xf32>
    %23 = arith.negf %22 : vector<256x16xf32>
    %24 = math.exp %23 : vector<256x16xf32>
    %cst_17 = arith.constant 1.000000e+00 : f32
    %25 = vector.broadcast %cst_17 : f32 to vector<256x16xf32>
    %26 = arith.addf %25, %24 : vector<256x16xf32>
    %27 = arith.divf %25, %26 : vector<256x16xf32>
    %c0_18 = arith.constant 0 : index
    %c0_19 = arith.constant 0 : index
    %28 = vector.load %arg8[%c0_18, %c0_19] : memref<256x16xf32, #tpu.memory_space<vmem>>, vector<256x16xf32>
    tpu.vector_store %arg8[%c0_18, %c0_19], %27 {strides = array<i32>} : memref<256x16xf32, #tpu.memory_space<vmem>>, vector<256x16xf32>,
    return
  }
  func.func @transform_0(%arg0: i32) -> (i32, i32) {
    %c0_i32 = arith.constant 0 : i32
    %c0_i32_0 = arith.constant 0 : i32
    return %arg0, %c0_i32 : i32, i32
  }
  func.func @transform_1(%arg0: i32) -> (i32, i32) {
    %c0_i32 = arith.constant 0 : i32
    %c0_i32_0 = arith.constant 0 : i32
    %c0_i32_1 = arith.constant 0 : i32
    return %c0_i32, %c0_i32_0 : i32, i32
  }
  func.func @transform_2(%arg0: i32) -> (i32, i32) {
    %c0_i32 = arith.constant 0 : i32
    %c0_i32_0 = arith.constant 0 : i32
    %c0_i32_1 = arith.constant 0 : i32
    return %c0_i32, %c0_i32_0 : i32, i32
  }
  func.func @transform_3(%arg0: i32) -> (i32, i32) {
    %c0_i32 = arith.constant 0 : i32
    %c0_i32_0 = arith.constant 0 : i32
    %c0_i32_1 = arith.constant 0 : i32
    return %c0_i32, %c0_i32_0 : i32, i32
  }
  func.func @transform_4(%arg0: i32) -> (i32, i32) {
    %c0_i32 = arith.constant 0 : i32
    %c0_i32_0 = arith.constant 0 : i32
    %c0_i32_1 = arith.constant 0 : i32
    return %c0_i32, %c0_i32_0 : i32, i32
  }
  func.func @transform_5(%arg0: i32) -> (i32, i32) {
    %c0_i32 = arith.constant 0 : i32
    %c0_i32_0 = arith.constant 0 : i32
    %c0_i32_1 = arith.constant 0 : i32
    return %c0_i32, %c0_i32_0 : i32, i32
  }
  func.func @transform_6(%arg0: i32) -> (i32, i32) {
    %c0_i32 = arith.constant 0 : i32
    %c0_i32_0 = arith.constant 0 : i32
    %c0_i32_1 = arith.constant 0 : i32
    return %c0_i32, %c0_i32_0 : i32, i32
  }
  func.func @transform_7(%arg0: i32) -> (i32, i32) {
    %c0_i32 = arith.constant 0 : i32
    %c0_i32_0 = arith.constant 0 : i32
    return %arg0, %c0_i32 : i32, i32
  }
}

</mosaic_0001>

<llo_original>
// kernel: tpu_custom_call.1
$region0: #{tpu_custom_call.1}
  #allocation0 [shape = 'u32[]', space=smem, size = 0x4, offset = 0x4, fixed_abs, tag = 'smem constant byte address 0x4 - core index']
  #allocation1 [shape = 'u32[144,128]{1,0:T(1,128)}', space=vmem, size = 0x12000, scoped, tag = 'internal scratch']
  %s0 = inlined_call_operand.vmem [shape: f32[288,32], index: 0, kind: input, shape index: {}]
  %s1 = inlined_call_operand.vmem [shape: bf16[32,128], index: 1, kind: input, shape index: {}]
  %s2 = inlined_call_operand.vmem [shape: f32[1,128], index: 2, kind: input, shape index: {}]
  %s3 = inlined_call_operand.vmem [shape: bf16[128,128], index: 3, kind: input, shape index: {}]
  %s4 = inlined_call_operand.vmem [shape: f32[1,128], index: 4, kind: input, shape index: {}]
  %s5 = inlined_call_operand.vmem [shape: bf16[128,16], index: 5, kind: input, shape index: {}]
  %s6 = inlined_call_operand.vmem [shape: f32[1,16], index: 6, kind: input, shape index: {}]
  %s7 = inlined_call_operand.vmem [shape: f32[288,16], index: 7, kind: output, shape index: {}]
  %s8 = sld [smem:[#allocation0]]
  $region109: #{tpu_custom_call.1} parent=0
    _
  %s10 = ssub.s32 1, %s8
  %s11 = scalar_select 0, %s10, %s8
  $region1: #{tpu_custom_call.1} parent=0
    #allocation2 [shape = 'u8[262144]{0}', space=vmem, size = 0x40000, scoped, tag = 'output window, operand 0']
    loop: start=0, step=1, limit=4
    $region2: #{tpu_custom_call.1} parent=1 // loop_pre_header
      _
    $region3: #{tpu_custom_call.1} parent=1 // loop_header
      %s13 = sphi 0, %s17
      %p14 = scmp.ge.s32.totalorder %s13, 4
      %s23 = sphi 0, %s25
      %s26 = sphi 0, %s23
      %s27 = sphi 0, %s26
      %s43 = sphi 0, %s27
      %s47 = sphi 0, %s47
      %s49 = sphi 0, %s47
      %s50 = sphi 0, %s49
      %s64 = sphi 0, %s50
      %s68 = sphi 0, %s68
      %s70 = sphi 0, %s68
      %s71 = sphi 0, %s70
      %s85 = sphi 0, %s71
      %s89 = sphi 0, %s89
      %s91 = sphi 0, %s89
      %s92 = sphi 0, %s91
      %s106 = sphi 0, %s92
      %s110 = sphi 0, %s110
      %s112 = sphi 0, %s110
      %s113 = sphi 0, %s112
      %s127 = sphi 0, %s113
      %s131 = sphi 0, %s131
      %s133 = sphi 0, %s131
      %s134 = sphi 0, %s133
      %s148 = sphi 0, %s134
      %s152 = sphi 0, %s152
      %s154 = sphi 0, %s152
      %s155 = sphi 0, %s154
      %s169 = sphi 0, %s155
      %s175 = sphi 0, %s177
      %s178 = sphi 0, %s175
      %s179 = sphi 0, %s178
      %s195 = sphi 0, %s179
    $region4: #{tpu_custom_call.1} parent=1 // loop_header_branch
      %16 = sbr.rel (%p14) target = $region8
    $region5: #{tpu_custom_call.1} parent=1 // loop_body
      %s18 = ssub.s32 %s13, 1
      %s19 = ssub.s32 %s13, 2
      %s20 = sadd.s32 %s13, 1
      %s21 = ssub.s32 %s13, %s20
      %p22 = scmp.eq.s32.totalorder %s21, 0
      %s24 = sadd.s32 %s23, 1
      %s25 = scalar_select %p22, %s23, %s24
      %p28 = pneg %p22
      %p29 = scmp.eq.s32.totalorder %s13, 1
      %p30 = por %p28, %p29
      %p31 = scmp.ne.s32.totalorder %s23, %s26
      %p32 = scmp.eq.s32.totalorder %s13, 0
      %p33 = por %p31, %p32
      %p34 = scmp.ne.s32.totalorder %s23, %s26
      %p35 = scmp.eq.s32.totalorder %s18, 1
      %p36 = por %p34, %p35
      %p37 = scmp.ne.s32.totalorder %s26, %s27
      %p38 = scmp.eq.s32.totalorder %s18, 0
      %p39 = por %p37, %p38
      %p40 = scmp.ne.s32.totalorder %s26, %s27
      %p41 = scmp.eq.s32.totalorder %s19, 1
      %p42 = por %p40, %p41
      %p44 = scmp.ne.s32.totalorder %s27, %s43
      %p45 = scmp.eq.s32.totalorder %s19, 0
      %p46 = por %p44, %p45
      %s48 = sadd.s32 %s47, 1
      %p51 = scmp.eq.s32.totalorder %s13, 1
      %p52 = scmp.ne.s32.totalorder %s47, %s49
      %p53 = scmp.eq.s32.totalorder %s13, 0
      %p54 = por %p52, %p53
      %p55 = scmp.ne.s32.totalorder %s47, %s49
      %p56 = scmp.eq.s32.totalorder %s18, 1
      %p57 = por %p55, %p56
      %p58 = scmp.ne.s32.totalorder %s49, %s50
      %p59 = scmp.eq.s32.totalorder %s18, 0
      %p60 = por %p58, %p59
      %p61 = scmp.ne.s32.totalorder %s49, %s50
      %p62 = scmp.eq.s32.totalorder %s19, 1
      %p63 = por %p61, %p62
      %p65 = scmp.ne.s32.totalorder %s50, %s64
      %p66 = scmp.eq.s32.totalorder %s19, 0
      %p67 = por %p65, %p66
      %s69 = sadd.s32 %s68, 1
      %p72 = scmp.eq.s32.totalorder %s13, 1
      %p73 = scmp.ne.s32.totalorder %s68, %s70
      %p74 = scmp.eq.s32.totalorder %s13, 0
      %p75 = por %p73, %p74
      %p76 = scmp.ne.s32.totalorder %s68, %s70
      %p77 = scmp.eq.s32.totalorder %s18, 1
      %p78 = por %p76, %p77
      %p79 = scmp.ne.s32.totalorder %s70, %s71
      %p80 = scmp.eq.s32.totalorder %s18, 0
      %p81 = por %p79, %p80
      %p82 = scmp.ne.s32.totalorder %s70, %s71
      %p83 = scmp.eq.s32.totalorder %s19, 1
      %p84 = por %p82, %p83
      %p86 = scmp.ne.s32.totalorder %s71, %s85
      %p87 = scmp.eq.s32.totalorder %s19, 0
      %p88 = por %p86, %p87
      %s90 = sadd.s32 %s89, 1
      %p93 = scmp.eq.s32.totalorder %s13, 1
      %p94 = scmp.ne.s32.totalorder %s89, %s91
      %p95 = scmp.eq.s32.totalorder %s13, 0
      %p96 = por %p94, %p95
      %p97 = scmp.ne.s32.totalorder %s89, %s91
      %p98 = scmp.eq.s32.totalorder %s18, 1
      %p99 = por %p97, %p98
      %p100 = scmp.ne.s32.totalorder %s91, %s92
      %p101 = scmp.eq.s32.totalorder %s18, 0
      %p102 = por %p100, %p101
      %p103 = scmp.ne.s32.totalorder %s91, %s92
      %p104 = scmp.eq.s32.totalorder %s19, 1
      %p105 = por %p103, %p104
      %p107 = scmp.ne.s32.totalorder %s92, %s106
      %p108 = scmp.eq.s32.totalorder %s19, 0
      %p109 = por %p107, %p108
      %s111 = sadd.s32 %s110, 1
      %p114 = scmp.eq.s32.totalorder %s13, 1
      %p115 = scmp.ne.s32.totalorder %s110, %s112
      %p116 = scmp.eq.s32.totalorder %s13, 0
      %p117 = por %p115, %p116
      %p118 = scmp.ne.s32.totalorder %s110, %s112
      %p119 = scmp.eq.s32.totalorder %s18, 1
      %p120 = por %p118, %p119
      %p121 = scmp.ne.s32.totalorder %s112, %s113
      %p122 = scmp.eq.s32.totalorder %s18, 0
      %p123 = por %p121, %p122
      %p124 = scmp.ne.s32.totalorder %s112, %s113
      %p125 = scmp.eq.s32.totalorder %s19, 1
      %p126 = por %p124, %p125
      %p128 = scmp.ne.s32.totalorder %s113, %s127
      %p129 = scmp.eq.s32.totalorder %s19, 0
      %p130 = por %p128, %p129
      %s132 = sadd.s32 %s131, 1
      %p135 = scmp.eq.s32.totalorder %s13, 1
      %p136 = scmp.ne.s32.totalorder %s131, %s133
      %p137 = scmp.eq.s32.totalorder %s13, 0
      %p138 = por %p136, %p137
      %p139 = scmp.ne.s32.totalorder %s131, %s133
      %p140 = scmp.eq.s32.totalorder %s18, 1
      %p141 = por %p139, %p140
      %p142 = scmp.ne.s32.totalorder %s133, %s134
      %p143 = scmp.eq.s32.totalorder %s18, 0
      %p144 = por %p142, %p143
      %p145 = scmp.ne.s32.totalorder %s133, %s134
      %p146 = scmp.eq.s32.totalorder %s19, 1
      %p147 = por %p145, %p146
      %p149 = scmp.ne.s32.totalorder %s134, %s148
      %p150 = scmp.eq.s32.totalorder %s19, 0
      %p151 = por %p149, %p150
      %s153 = sadd.s32 %s152, 1
      %p156 = scmp.eq.s32.totalorder %s13, 1
      %p157 = scmp.ne.s32.totalorder %s152, %s154
      %p158 = scmp.eq.s32.totalorder %s13, 0
      %p159 = por %p157, %p158
      %p160 = scmp.ne.s32.totalorder %s152, %s154
      %p161 = scmp.eq.s32.totalorder %s18, 1
      %p162 = por %p160, %p161
      %p163 = scmp.ne.s32.totalorder %s154, %s155
      %p164 = scmp.eq.s32.totalorder %s18, 0
      %p165 = por %p163, %p164
      %p166 = scmp.ne.s32.totalorder %s154, %s155
      %p167 = scmp.eq.s32.totalorder %s19, 1
      %p168 = por %p166, %p167
      %p170 = scmp.ne.s32.totalorder %s155, %s169
      %p171 = scmp.eq.s32.totalorder %s19, 0
      %p172 = por %p170, %p171
      %s173 = ssub.s32 %s13, %s20
      %p174 = scmp.eq.s32.totalorder %s173, 0
      %s176 = sadd.s32 %s175, 1
      %s177 = scalar_select %p174, %s175, %s176
      %p180 = pneg %p174
      %p181 = scmp.eq.s32.totalorder %s13, 1
      %p182 = por %p180, %p181
      %p183 = scmp.ne.s32.totalorder %s175, %s178
      %p184 = scmp.eq.s32.totalorder %s13, 0
      %p185 = por %p183, %p184
      %p186 = scmp.ne.s32.totalorder %s175, %s178
      %p187 = scmp.eq.s32.totalorder %s18, 1
      %p188 = por %p186, %p187
      %p189 = scmp.ne.s32.totalorder %s178, %s179
      %p190 = scmp.eq.s32.totalorder %s18, 0
      %p191 = por %p189, %p190
      %p192 = scmp.ne.s32.totalorder %s178, %s179
      %p193 = scmp.eq.s32.totalorder %s19, 1
      %p194 = por %p192, %p193
      %p196 = scmp.ne.s32.totalorder %s179, %s195
      %p197 = scmp.eq.s32.totalorder %s19, 0
      %p198 = por %p196, %p197
      %p199 = scmp.le.s32.totalorder 1, %s13
      %p200 = scmp.lt.s32.totalorder %s13, 3
      %p201 = pnand %p199, %p200
      %p202 = pneg %p201
      // Predicated region
      $region9: #{tpu_custom_call.1} parent=5 // pred_check
        _
      $region10: #{tpu_custom_call.1} parent=5 // pred_check_branch
        %204 = sbr.rel (%p201) target = $region12
      $region11: #{tpu_custom_call.1} parent=5 // pred_region
        %s205 = ssub.s32 %s13, 1
        // Predicated region
        $region13: #{tpu_custom_call.1} parent=11 // pred_check
          %p206 = pneg %p60
        $region14: #{tpu_custom_call.1} parent=11 // pred_check_branch
          %208 = sbr.rel (%p206) target = $region16
        $region15: #{tpu_custom_call.1} parent=11 // pred_region
          _
        $region16: #{tpu_custom_call.1} parent=11 // pred_fallthru
          _
        // Predicated region
        $region17: #{tpu_custom_call.1} parent=11 // pred_check
          %p209 = pneg %p81
        $region18: #{tpu_custom_call.1} parent=11 // pred_check_branch
          %211 = sbr.rel (%p209) target = $region20
        $region19: #{tpu_custom_call.1} parent=11 // pred_region
          _
        $region20: #{tpu_custom_call.1} parent=11 // pred_fallthru
          _
        // Predicated region
        $region21: #{tpu_custom_call.1} parent=11 // pred_check
          %p212 = pneg %p102
        $region22: #{tpu_custom_call.1} parent=11 // pred_check_branch
          %214 = sbr.rel (%p212) target = $region24
        $region23: #{tpu_custom_call.1} parent=11 // pred_region
          _
        $region24: #{tpu_custom_call.1} parent=11 // pred_fallthru
          _
        // Predicated region
        $region25: #{tpu_custom_call.1} parent=11 // pred_check
          %p215 = pneg %p123
        $region26: #{tpu_custom_call.1} parent=11 // pred_check_branch
          %217 = sbr.rel (%p215) target = $region28
        $region27: #{tpu_custom_call.1} parent=11 // pred_region
          _
        $region28: #{tpu_custom_call.1} parent=11 // pred_fallthru
          _
        // Predicated region
        $region29: #{tpu_custom_call.1} parent=11 // pred_check
          %p218 = pneg %p144
        $region30: #{tpu_custom_call.1} parent=11 // pred_check_branch
          %220 = sbr.rel (%p218) target = $region32
        $region31: #{tpu_custom_call.1} parent=11 // pred_region
          _
        $region32: #{tpu_custom_call.1} parent=11 // pred_fallthru
          _
        // Predicated region
        $region33: #{tpu_custom_call.1} parent=11 // pred_check
          %p221 = pneg %p165
        $region34: #{tpu_custom_call.1} parent=11 // pred_check_branch
          %223 = sbr.rel (%p221) target = $region36
        $region35: #{tpu_custom_call.1} parent=11 // pred_region
          _
        $region36: #{tpu_custom_call.1} parent=11 // pred_fallthru
          _
      $region12: #{tpu_custom_call.1} parent=5 // pred_fallthru
        _
      %p224 = scmp.lt.s32.totalorder %s13, 2
      // Predicated region
      $region37: #{tpu_custom_call.1} parent=5 // pred_check
        %p225 = pneg %p224
      $region38: #{tpu_custom_call.1} parent=5 // pred_check_branch
        %227 = sbr.rel (%p225) target = $region40
      $region39: #{tpu_custom_call.1} parent=5 // pred_region
        // Predicated region
        $region41: #{tpu_custom_call.1} parent=39 // pred_check
          %p228 = pneg %p33
        $region42: #{tpu_custom_call.1} parent=39 // pred_check_branch
          %230 = sbr.rel (%p228) target = $region44
        $region43: #{tpu_custom_call.1} parent=39 // pred_region
          %s231 = smul.u32 32, %s13
          %s232 = ssub.s32 36, %s231
          %p233 = scmp.lt.s32.totalorder %s232, 32
          %s234 = scalar_select %p233, %s232, 32
          %s235 = smul.u32 128, %s234
          %p236 = scmp.lt.s32.totalorder %s231, 35
          %s237 = scalar_select %p236, %s231, 35
          %s238 = smul.addr %s237, 8
          %s239 = scalar_lea.vmem %s0, %s238
          %s240 = smul.u32 32, %s13
          %s241 = ssub.s32 36, %s240
          %p242 = scmp.lt.s32.totalorder %s241, 32
          %s243 = scalar_select %p242, %s241, 32
          %s244 = smul.u32 128, %s243
        $region44: #{tpu_custom_call.1} parent=39 // pred_fallthru
          _
      $region40: #{tpu_custom_call.1} parent=5 // pred_fallthru
        _
      %p245 = scmp.le.s32.totalorder 1, %s13
      %p246 = scmp.lt.s32.totalorder %s13, 3
      %p247 = pnand %p245, %p246
      %p248 = pneg %p247
      // Predicated region
      $region45: #{tpu_custom_call.1} parent=5 // pred_check
        _
      $region46: #{tpu_custom_call.1} parent=5 // pred_check_branch
        %250 = sbr.rel (%p247) target = $region48
      $region47: #{tpu_custom_call.1} parent=5 // pred_region
        %s251 = ssub.s32 %s13, 1
        %s252 = smul.u32 32, %s18
        %s253 = ssub.s32 36, %s252
        %p254 = scmp.lt.s32.totalorder %s253, 32
        %s255 = scalar_select %p254, %s253, 32
        %s256 = smul.u32 128, %s255
        %p257 = scmp.lt.s32.totalorder %s252, 35
        %s258 = scalar_select %p257, %s252, 35
        %s259 = smul.addr %s258, 8
        %s260 = scalar_lea.vmem %s0, %s259
        %p261 = pneg %p39
        %p262 = pneg %p36
        %p263 = pneg %p60
        %p264 = pneg %p57
        %p265 = pneg %p81
        %p266 = pneg %p78
        %p267 = pneg %p102
        %p268 = pneg %p99
        %p269 = pneg %p123
        %p270 = pneg %p120
        %p271 = pneg %p144
        %p272 = pneg %p141
        %p273 = pneg %p165
        %p274 = pneg %p162
        %p275 = pneg %p191
        %p276 = pneg %p188
        %s277 = sand.u32 %s178, 1
        %s278 = sand.u32 %s178, 1
        %s279 = smul.addr %s278, 256
        %s280 = scalar_lea.vmem [#allocation2], %s279
        %s281 = smul.u32 32, %s18
        %s282 = ssub.s32 36, %s281
        %p283 = scmp.lt.s32.totalorder %s282, 32
        %s284 = scalar_select %p283, %s282, 32
        %s285 = smul.u32 128, %s284
        %p286 = scmp.lt.s32.totalorder %s281, 35
        %s287 = scalar_select %p286, %s281, 35
        %s288 = smul.addr %s287, 8
        %s289 = scalar_lea.vmem %s0, %s288
        %s290 = smul.u32 32, %s18
        %s291 = ssub.s32 36, %s290
        %p292 = scmp.lt.s32.totalorder %s291, 32
        %s293 = scalar_select %p292, %s291, 32
        %s294 = smul.u32 128, %s293
        %s295 = smul.u32 32, %s18
        %s296 = ssub.s32 36, %s295
        %p297 = scmp.lt.s32.totalorder %s296, 32
        %s298 = scalar_select %p297, %s296, 32
        %s299 = smul.u32 128, %s298
        %v301 = vld [vmem:[%s289] sm:$0xff]
        %v302 = vld [vmem:[%s289 + $0x8] sm:$0xff]
        %v303 = vld [vmem:[%s289 + $0x10] sm:$0xff]
        %v304 = vld [vmem:[%s289 + $0x18] sm:$0xff]
        %v305 = vld [vmem:[%s289 + $0x20] sm:$0xff]
        %v306 = vld [vmem:[%s289 + $0x28] sm:$0xff]
        %v307 = vld [vmem:[%s289 + $0x30] sm:$0xff]
        %v308 = vld [vmem:[%s289 + $0x38] sm:$0xff]
        %v309 = vld [vmem:[%s289 + $0x40] sm:$0xff]
        %v310 = vld [vmem:[%s289 + $0x48] sm:$0xff]
        %v311 = vld [vmem:[%s289 + $0x50] sm:$0xff]
        %v312 = vld [vmem:[%s289 + $0x58] sm:$0xff]
        %v313 = vld [vmem:[%s289 + $0x60] sm:$0xff]
        %v314 = vld [vmem:[%s289 + $0x68] sm:$0xff]
        %v315 = vld [vmem:[%s289 + $0x70] sm:$0xff]
        %v316 = vld [vmem:[%s289 + $0x78] sm:$0xff]
        %v317 = vld [vmem:[%s289 + $0x80] sm:$0xff]
        %v318 = vld [vmem:[%s289 + $0x88] sm:$0xff]
        %v319 = vld [vmem:[%s289 + $0x90] sm:$0xff]
        %v320 = vld [vmem:[%s289 + $0x98] sm:$0xff]
        %v321 = vld [vmem:[%s289 + $0xa0] sm:$0xff]
        %v322 = vld [vmem:[%s289 + $0xa8] sm:$0xff]
        %v323 = vld [vmem:[%s289 + $0xb0] sm:$0xff]
        %v324 = vld [vmem:[%s289 + $0xb8] sm:$0xff]
        %v325 = vld [vmem:[%s289 + $0xc0] sm:$0xff]
        %v326 = vld [vmem:[%s289 + $0xc8] sm:$0xff]
        %v327 = vld [vmem:[%s289 + $0xd0] sm:$0xff]
        %v328 = vld [vmem:[%s289 + $0xd8] sm:$0xff]
        %v329 = vld [vmem:[%s289 + $0xe0] sm:$0xff]
        %v330 = vld [vmem:[%s289 + $0xe8] sm:$0xff]
        %v331 = vld [vmem:[%s289 + $0xf0] sm:$0xff]
        %v332 = vld [vmem:[%s289 + $0xf8] sm:$0xff]
        %v333 = vpack.c.bf16 %v302, %v301
        %v334 = vpack.c.bf16 %v304, %v303
        %v335 = vpack.c.bf16 %v306, %v305
        %v336 = vpack.c.bf16 %v308, %v307
        %v337 = vpack.c.bf16 %v310, %v309
        %v338 = vpack.c.bf16 %v312, %v311
        %v339 = vpack.c.bf16 %v314, %v313
        %v340 = vpack.c.bf16 %v316, %v315
        %v341 = vpack.c.bf16 %v318, %v317
        %v342 = vpack.c.bf16 %v320, %v319
        %v343 = vpack.c.bf16 %v322, %v321
        %v344 = vpack.c.bf16 %v324, %v323
        %v345 = vpack.c.bf16 %v326, %v325
        %v346 = vpack.c.bf16 %v328, %v327
        %v347 = vpack.c.bf16 %v330, %v329
        %v348 = vpack.c.bf16 %v332, %v331
        %v349 = vld [vmem:[%s1] sm:$0xf]
        %v350 = vld [vmem:[%s1 + $0x4] sm:$0xf]
        %v351 = vld [vmem:[%s1 + $0x8] sm:$0xf]
        %v352 = vld [vmem:[%s1 + $0xc] sm:$0xf]
        %v353 = vld [vmem:[%s2] sm:$0x1]
        %v355 = vlaneseq
        %v356 = vshrl.u32 %v355, 7
        %v357 = vsub.s32 0, %v356
        %v358 = vrot.slane %v353, %v357
        %v364 = vunpack.c.l.b16 %v349
        %v365 = vunpack.c.l.b16 %v350
        %v366 = vunpack.c.l.b16 %v351
        %v367 = vunpack.c.l.b16 %v352
        %v368 = vpack.c.b16 %v365, %v364
        %v369 = vpack.c.b16 %v367, %v366
        %vm372 = vcmask 261120
        %v374 = vsel %vm372, %v333, 0
        %v377 = vsel %vm372, %v334, 0
        %v380 = vsel %vm372, %v335, 0
        %v383 = vsel %vm372, %v336, 0
        %v386 = vsel %vm372, %v337, 0
        %v389 = vsel %vm372, %v338, 0
        %v392 = vsel %vm372, %v339, 0
        %v395 = vsel %vm372, %v340, 0
        %v398 = vsel %vm372, %v341, 0
        %v401 = vsel %vm372, %v342, 0
        %v404 = vsel %vm372, %v343, 0
        %v407 = vsel %vm372, %v344, 0
        %v410 = vsel %vm372, %v345, 0
        %v413 = vsel %vm372, %v346, 0
        %v416 = vsel %vm372, %v347, 0
        %v419 = vsel %vm372, %v348, 0
        %421 = vmatprep.subr.bf16.mxu0 0
        %422 = vmatpush1.bf16.msra.mxu0 %v368
        %423 = vmatprep.subr.bf16.mxu0 0
        %424 = vmatpush1.bf16.msra.mxu0 %v369
        %425 = vmatprep.subr.bf16.mxu0 0
        %426 = vmatpush1.bf16.msra.mxu0 0
        %427 = vmatprep.subr.bf16.mxu0 0
        %428 = vmatpush1.bf16.msra.mxu0 0
        %429 = vmatprep.subr.bf16.mxu0 0
        %430 = vmatpush1.bf16.msra.mxu0 0
        %431 = vmatprep.subr.bf16.mxu0 0
        %432 = vmatpush1.bf16.msra.mxu0 0
        %433 = vmatprep.subr.bf16.mxu0 0
        %434 = vmatpush1.bf16.msra.mxu0 0
        %435 = vmatprep.subr.bf16.mxu0 0
        %436 = vmatpush1.bf16.msra.mxu0 0
        %437 = vmatprep.subr.bf16.mxu0 0
        %438 = vmatpush1.bf16.msra.mxu0 0
        %439 = vmatprep.subr.bf16.mxu0 0
        %440 = vmatpush1.bf16.msra.mxu0 0
        %441 = vmatprep.subr.bf16.mxu0 0
        %442 = vmatpush1.bf16.msra.mxu0 0
        %443 = vmatprep.subr.bf16.mxu0 0
        %444 = vmatpush1.bf16.msra.mxu0 0
        %445 = vmatprep.subr.bf16.mxu0 0
        %446 = vmatpush1.bf16.msra.mxu0 0
        %447 = vmatprep.subr.bf16.mxu0 0
        %448 = vmatpush1.bf16.msra.mxu0 0
        %449 = vmatprep.subr.bf16.mxu0 0
        %450 = vmatpush1.bf16.msra.mxu0 0
        %451 = vmatprep.subr.bf16.mxu0 0
        %452 = vmatpush1.bf16.msra.mxu0 0
        %453 = vmatprep.mubr.bf16.mxu0 0
        %454 = vmatmul.mubr.bf16.gmra.mrb[0].mxu0 %v374
        %v455 = vpop.f32.mrb[0].mxu0
        %v456 = vadd.f32 %v358, %v455
        %v457 = vpop.f32.mrb[0].mxu0
        %v458 = vpop.f32.mrb[0].mxu0
        %v459 = vadd.f32 %v358, %v458
        %v460 = vpop.f32.mrb[0].mxu0
        %461 = vmatprep.mubr.bf16.mxu0 0
        %462 = vmatmul.mubr.bf16.gmra.mrb[0].mxu0 %v377
        %v463 = vpop.f32.mrb[0].mxu0
        %v464 = vadd.f32 %v358, %v463
        %v465 = vpop.f32.mrb[0].mxu0
        %v466 = vpop.f32.mrb[0].mxu0
        %v467 = vadd.f32 %v358, %v466
        %v468 = vpop.f32.mrb[0].mxu0
        %469 = vmatprep.mubr.bf16.mxu0 0
        %470 = vmatmul.mubr.bf16.gmra.mrb[0].mxu0 %v380
        %v471 = vpop.f32.mrb[0].mxu0
        %v472 = vadd.f32 %v358, %v471
        %v473 = vpop.f32.mrb[0].mxu0
        %v474 = vpop.f32.mrb[0].mxu0
        %v475 = vadd.f32 %v358, %v474
        %v476 = vpop.f32.mrb[0].mxu0
        %477 = vmatprep.mubr.bf16.mxu0 0
        %478 = vmatmul.mubr.bf16.gmra.mrb[0].mxu0 %v383
        %v479 = vpop.f32.mrb[0].mxu0
        %v480 = vadd.f32 %v358, %v479
        %v481 = vpop.f32.mrb[0].mxu0
        %v482 = vpop.f32.mrb[0].mxu0
        %v483 = vadd.f32 %v358, %v482
        %v484 = vpop.f32.mrb[0].mxu0
        %485 = vmatprep.mubr.bf16.mxu0 0
        %486 = vmatmul.mubr.bf16.gmra.mrb[0].mxu0 %v386
        %v487 = vpop.f32.mrb[0].mxu0
        %v488 = vadd.f32 %v358, %v487
        %v489 = vpop.f32.mrb[0].mxu0
        %v490 = vpop.f32.mrb[0].mxu0
        %v491 = vadd.f32 %v358, %v490
        %v492 = vpop.f32.mrb[0].mxu0
        %493 = vmatprep.mubr.bf16.mxu0 0
        %494 = vmatmul.mubr.bf16.gmra.mrb[0].mxu0 %v389
        %v495 = vpop.f32.mrb[0].mxu0
        %v496 = vadd.f32 %v358, %v495
        %v497 = vpop.f32.mrb[0].mxu0
        %v498 = vpop.f32.mrb[0].mxu0
        %v499 = vadd.f32 %v358, %v498
        %v500 = vpop.f32.mrb[0].mxu0
        %501 = vmatprep.mubr.bf16.mxu0 0
        %502 = vmatmul.mubr.bf16.gmra.mrb[0].mxu0 %v392
        %v503 = vpop.f32.mrb[0].mxu0
        %v504 = vadd.f32 %v358, %v503
        %v505 = vpop.f32.mrb[0].mxu0
        %v506 = vpop.f32.mrb[0].mxu0
        %v507 = vadd.f32 %v358, %v506
        %v508 = vpop.f32.mrb[0].mxu0
        %509 = vmatprep.mubr.bf16.mxu0 0
        %510 = vmatmul.mubr.bf16.gmra.mrb[0].mxu0 %v395
        %v511 = vpop.f32.mrb[0].mxu0
        %v512 = vadd.f32 %v358, %v511
        %v513 = vpop.f32.mrb[0].mxu0
        %v514 = vpop.f32.mrb[0].mxu0
        %v515 = vadd.f32 %v358, %v514
        %v516 = vpop.f32.mrb[0].mxu0
        %517 = vmatprep.mubr.bf16.mxu0 0
        %518 = vmatmul.mubr.bf16.gmra.mrb[0].mxu0 %v398
        %v519 = vpop.f32.mrb[0].mxu0
        %v520 = vadd.f32 %v358, %v519
        %v521 = vpop.f32.mrb[0].mxu0
        %v522 = vpop.f32.mrb[0].mxu0
        %v523 = vadd.f32 %v358, %v522
        %v524 = vpop.f32.mrb[0].mxu0
        %525 = vmatprep.mubr.bf16.mxu0 0
        %526 = vmatmul.mubr.bf16.gmra.mrb[0].mxu0 %v401
        %v527 = vpop.f32.mrb[0].mxu0
        %v528 = vadd.f32 %v358, %v527
        %v529 = vpop.f32.mrb[0].mxu0
        %v530 = vpop.f32.mrb[0].mxu0
        %v531 = vadd.f32 %v358, %v530
        %v532 = vpop.f32.mrb[0].mxu0
        %533 = vmatprep.mubr.bf16.mxu0 0
        %534 = vmatmul.mubr.bf16.gmra.mrb[0].mxu0 %v404
        %v535 = vpop.f32.mrb[0].mxu0
        %v536 = vadd.f32 %v358, %v535
        %v537 = vpop.f32.mrb[0].mxu0
        %v538 = vpop.f32.mrb[0].mxu0
        %v539 = vadd.f32 %v358, %v538
        %v540 = vpop.f32.mrb[0].mxu0
        %541 = vmatprep.mubr.bf16.mxu0 0
        %542 = vmatmul.mubr.bf16.gmra.mrb[0].mxu0 %v407
        %v543 = vpop.f32.mrb[0].mxu0
        %v544 = vadd.f32 %v358, %v543
        %v545 = vpop.f32.mrb[0].mxu0
        %v546 = vpop.f32.mrb[0].mxu0
        %v547 = vadd.f32 %v358, %v546
        %v548 = vpop.f32.mrb[0].mxu0
        %549 = vmatprep.mubr.bf16.mxu0 0
        %550 = vmatmul.mubr.bf16.gmra.mrb[0].mxu0 %v410
        %v551 = vpop.f32.mrb[0].mxu0
        %v552 = vadd.f32 %v358, %v551
        %v553 = vpop.f32.mrb[0].mxu0
        %v554 = vpop.f32.mrb[0].mxu0
        %v555 = vadd.f32 %v358, %v554
        %v556 = vpop.f32.mrb[0].mxu0
        %557 = vmatprep.mubr.bf16.mxu0 0
        %558 = vmatmul.mubr.bf16.gmra.mrb[0].mxu0 %v413
        %v559 = vpop.f32.mrb[0].mxu0
        %v560 = vadd.f32 %v358, %v559
        %v561 = vpop.f32.mrb[0].mxu0
        %v562 = vpop.f32.mrb[0].mxu0
        %v563 = vadd.f32 %v358, %v562
        %v564 = vpop.f32.mrb[0].mxu0
        %565 = vmatprep.mubr.bf16.mxu0 0
        %566 = vmatmul.mubr.bf16.gmra.mrb[0].mxu0 %v416
        %v567 = vpop.f32.mrb[0].mxu0
        %v568 = vadd.f32 %v358, %v567
        %v569 = vpop.f32.mrb[0].mxu0
        %v570 = vpop.f32.mrb[0].mxu0
        %v571 = vadd.f32 %v358, %v570
        %v572 = vpop.f32.mrb[0].mxu0
        %573 = vmatprep.mubr.bf16.mxu0 0
        %574 = vmatmul.mubr.bf16.gmra.mrb[0].mxu0 %v419
        %v575 = vpop.f32.mrb[0].mxu0
        %v576 = vadd.f32 %v358, %v575
        %v577 = vpop.f32.mrb[0].mxu0
        %v578 = vpop.f32.mrb[0].mxu0
        %v579 = vadd.f32 %v358, %v578
        %v580 = vpop.f32.mrb[0].mxu0
        %581 = vdwg.mxu0
        %v582 = vmax.f32 %v456, 0.0
        %v583 = vmax.f32 %v459, 0.0
        %v584 = vmax.f32 %v464, 0.0
        %v585 = vmax.f32 %v467, 0.0
        %v586 = vmax.f32 %v472, 0.0
        %v587 = vmax.f32 %v475, 0.0
        %v588 = vmax.f32 %v480, 0.0
        %v589 = vmax.f32 %v483, 0.0
        %v590 = vmax.f32 %v488, 0.0
        %v591 = vmax.f32 %v491, 0.0
        %v592 = vmax.f32 %v496, 0.0
        %v593 = vmax.f32 %v499, 0.0
        %v594 = vmax.f32 %v504, 0.0
        %v595 = vmax.f32 %v507, 0.0
        %v596 = vmax.f32 %v512, 0.0
        %v597 = vmax.f32 %v515, 0.0
        %v598 = vmax.f32 %v520, 0.0
        %v599 = vmax.f32 %v523, 0.0
        %v600 = vmax.f32 %v528, 0.0
        %v601 = vmax.f32 %v531, 0.0
        %v602 = vmax.f32 %v536, 0.0
        %v603 = vmax.f32 %v539, 0.0
        %v604 = vmax.f32 %v544, 0.0
        %v605 = vmax.f32 %v547, 0.0
        %v606 = vmax.f32 %v552, 0.0
        %v607 = vmax.f32 %v555, 0.0
        %v608 = vmax.f32 %v560, 0.0
        %v609 = vmax.f32 %v563, 0.0
        %v610 = vmax.f32 %v568, 0.0
        %v611 = vmax.f32 %v571, 0.0
        %v612 = vmax.f32 %v576, 0.0
        %v613 = vmax.f32 %v579, 0.0
        %v614 = vpack.c.bf16 %v583, %v582
        %v615 = vpack.c.bf16 %v585, %v584
        %v616 = vpack.c.bf16 %v587, %v586
        %v617 = vpack.c.bf16 %v589, %v588
        %v618 = vpack.c.bf16 %v591, %v590
        %v619 = vpack.c.bf16 %v593, %v592
        %v620 = vpack.c.bf16 %v595, %v594
        %v621 = vpack.c.bf16 %v597, %v596
        %v622 = vpack.c.bf16 %v599, %v598
        %v623 = vpack.c.bf16 %v601, %v600
        %v624 = vpack.c.bf16 %v603, %v602
        %v625 = vpack.c.bf16 %v605, %v604
        %v626 = vpack.c.bf16 %v607, %v606
        %v627 = vpack.c.bf16 %v609, %v608
        %v628 = vpack.c.bf16 %v611, %v610
        %v629 = vpack.c.bf16 %v613, %v612
        %v630 = vld [vmem:[%s3] sm:$0xf]
        %v631 = vld [vmem:[%s3 + $0x4] sm:$0xf]
        %v632 = vld [vmem:[%s3 + $0x8] sm:$0xf]
        %v633 = vld [vmem:[%s3 + $0xc] sm:$0xf]
        %v634 = vld [vmem:[%s3 + $0x10] sm:$0xf]
        %v635 = vld [vmem:[%s3 + $0x14] sm:$0xf]
        %v636 = vld [vmem:[%s3 + $0x18] sm:$0xf]
        %v637 = vld [vmem:[%s3 + $0x1c] sm:$0xf]
        %v638 = vld [vmem:[%s3 + $0x20] sm:$0xf]
        %v639 = vld [vmem:[%s3 + $0x24] sm:$0xf]
        %v640 = vld [vmem:[%s3 + $0x28] sm:$0xf]
        %v641 = vld [vmem:[%s3 + $0x2c] sm:$0xf]
        %v642 = vld [vmem:[%s3 + $0x30] sm:$0xf]
        %v643 = vld [vmem:[%s3 + $0x34] sm:$0xf]
        %v644 = vld [vmem:[%s3 + $0x38] sm:$0xf]
        %v645 = vld [vmem:[%s3 + $0x3c] sm:$0xf]
        %v646 = vld [vmem:[%s4] sm:$0x1]
        %v648 = vlaneseq
        %v649 = vshrl.u32 %v648, 7
        %v650 = vsub.s32 0, %v649
        %v651 = vrot.slane %v646, %v650
        %v669 = vunpack.c.l.b16 %v630
        %v670 = vunpack.c.l.b16 %v631
        %v671 = vunpack.c.l.b16 %v632
        %v672 = vunpack.c.l.b16 %v633
        %v673 = vunpack.c.l.b16 %v634
        %v674 = vunpack.c.l.b16 %v635
        %v675 = vunpack.c.l.b16 %v636
        %v676 = vunpack.c.l.b16 %v637
        %v677 = vunpack.c.l.b16 %v638
        %v678 = vunpack.c.l.b16 %v639
        %v679 = vunpack.c.l.b16 %v640
        %v680 = vunpack.c.l.b16 %v641
        %v681 = vunpack.c.l.b16 %v642
        %v682 = vunpack.c.l.b16 %v643
        %v683 = vunpack.c.l.b16 %v644
        %v684 = vunpack.c.l.b16 %v645
        %v685 = vpack.c.b16 %v670, %v669
        %v686 = vpack.c.b16 %v672, %v671
        %v687 = vpack.c.b16 %v674, %v673
        %v688 = vpack.c.b16 %v676, %v675
        %v689 = vpack.c.b16 %v678, %v677
        %v690 = vpack.c.b16 %v680, %v679
        %v691 = vpack.c.b16 %v682, %v681
        %v692 = vpack.c.b16 %v684, %v683
        %701 = vmatprep.subr.bf16.mxu0 0
        %702 = vmatpush1.bf16.msra.mxu0 %v685
        %703 = vmatprep.subr.bf16.mxu0 0
        %704 = vmatpush1.bf16.msra.mxu0 %v686
        %705 = vmatprep.subr.bf16.mxu0 0
        %706 = vmatpush1.bf16.msra.mxu0 %v687
        %707 = vmatprep.subr.bf16.mxu0 0
        %708 = vmatpush1.bf16.msra.mxu0 %v688
        %709 = vmatprep.subr.bf16.mxu0 0
        %710 = vmatpush1.bf16.msra.mxu0 %v689
        %711 = vmatprep.subr.bf16.mxu0 0
        %712 = vmatpush1.bf16.msra.mxu0 %v690
        %713 = vmatprep.subr.bf16.mxu0 0
        %714 = vmatpush1.bf16.msra.mxu0 %v691
        %715 = vmatprep.subr.bf16.mxu0 0
        %716 = vmatpush1.bf16.msra.mxu0 %v692
        %717 = vmatprep.subr.bf16.mxu0 0
        %718 = vmatpush1.bf16.msra.mxu0 0
        %719 = vmatprep.subr.bf16.mxu0 0
        %720 = vmatpush1.bf16.msra.mxu0 0
        %721 = vmatprep.subr.bf16.mxu0 0
        %722 = vmatpush1.bf16.msra.mxu0 0
        %723 = vmatprep.subr.bf16.mxu0 0
        %724 = vmatpush1.bf16.msra.mxu0 0
        %725 = vmatprep.subr.bf16.mxu0 0
        %726 = vmatpush1.bf16.msra.mxu0 0
        %727 = vmatprep.subr.bf16.mxu0 0
        %728 = vmatpush1.bf16.msra.mxu0 0
        %729 = vmatprep.subr.bf16.mxu0 0
        %730 = vmatpush1.bf16.msra.mxu0 0
        %731 = vmatprep.subr.bf16.mxu0 0
        %732 = vmatpush1.bf16.msra.mxu0 0
        %733 = vmatprep.mubr.bf16.mxu0 0
        %734 = vmatmul.mubr.bf16.gmra.mrb[0].mxu0 %v614
        %v735 = vpop.f32.mrb[0].mxu0
        %v736 = vadd.f32 %v651, %v735
        %v737 = vpop.f32.mrb[0].mxu0
        %v738 = vpop.f32.mrb[0].mxu0
        %v739 = vadd.f32 %v651, %v738
        %v740 = vpop.f32.mrb[0].mxu0
        %741 = vmatprep.mubr.bf16.mxu0 0
        %742 = vmatmul.mubr.bf16.gmra.mrb[0].mxu0 %v615
        %v743 = vpop.f32.mrb[0].mxu0
        %v744 = vadd.f32 %v651, %v743
        %v745 = vpop.f32.mrb[0].mxu0
        %v746 = vpop.f32.mrb[0].mxu0
        %v747 = vadd.f32 %v651, %v746
        %v748 = vpop.f32.mrb[0].mxu0
        %749 = vmatprep.mubr.bf16.mxu0 0
        %750 = vmatmul.mubr.bf16.gmra.mrb[0].mxu0 %v616
        %v751 = vpop.f32.mrb[0].mxu0
        %v752 = vadd.f32 %v651, %v751
        %v753 = vpop.f32.mrb[0].mxu0
        %v754 = vpop.f32.mrb[0].mxu0
        %v755 = vadd.f32 %v651, %v754
        %v756 = vpop.f32.mrb[0].mxu0
        %757 = vmatprep.mubr.bf16.mxu0 0
        %758 = vmatmul.mubr.bf16.gmra.mrb[0].mxu0 %v617
        %v759 = vpop.f32.mrb[0].mxu0
        %v760 = vadd.f32 %v651, %v759
        %v761 = vpop.f32.mrb[0].mxu0
        %v762 = vpop.f32.mrb[0].mxu0
        %v763 = vadd.f32 %v651, %v762
        %v764 = vpop.f32.mrb[0].mxu0
        %765 = vmatprep.mubr.bf16.mxu0 0
        %766 = vmatmul.mubr.bf16.gmra.mrb[0].mxu0 %v618
        %v767 = vpop.f32.mrb[0].mxu0
        %v768 = vadd.f32 %v651, %v767
        %v769 = vpop.f32.mrb[0].mxu0
        %v770 = vpop.f32.mrb[0].mxu0
        %v771 = vadd.f32 %v651, %v770
        %v772 = vpop.f32.mrb[0].mxu0
        %773 = vmatprep.mubr.bf16.mxu0 0
        %774 = vmatmul.mubr.bf16.gmra.mrb[0].mxu0 %v619
        %v775 = vpop.f32.mrb[0].mxu0
        %v776 = vadd.f32 %v651, %v775
        %v777 = vpop.f32.mrb[0].mxu0
        %v778 = vpop.f32.mrb[0].mxu0
        %v779 = vadd.f32 %v651, %v778
        %v780 = vpop.f32.mrb[0].mxu0
        %781 = vmatprep.mubr.bf16.mxu0 0
        %782 = vmatmul.mubr.bf16.gmra.mrb[0].mxu0 %v620
        %v783 = vpop.f32.mrb[0].mxu0
        %v784 = vadd.f32 %v651, %v783
        %v785 = vpop.f32.mrb[0].mxu0
        %v786 = vpop.f32.mrb[0].mxu0
        %v787 = vadd.f32 %v651, %v786
        %v788 = vpop.f32.mrb[0].mxu0
        %789 = vmatprep.mubr.bf16.mxu0 0
        %790 = vmatmul.mubr.bf16.gmra.mrb[0].mxu0 %v621
        %v791 = vpop.f32.mrb[0].mxu0
        %v792 = vadd.f32 %v651, %v791
        %v793 = vpop.f32.mrb[0].mxu0
        %v794 = vpop.f32.mrb[0].mxu0
        %v795 = vadd.f32 %v651, %v794
        %v796 = vpop.f32.mrb[0].mxu0
        %797 = vmatprep.mubr.bf16.mxu0 0
        %798 = vmatmul.mubr.bf16.gmra.mrb[0].mxu0 %v622
        %v799 = vpop.f32.mrb[0].mxu0
        %v800 = vadd.f32 %v651, %v799
        %v801 = vpop.f32.mrb[0].mxu0
        %v802 = vpop.f32.mrb[0].mxu0
        %v803 = vadd.f32 %v651, %v802
        %v804 = vpop.f32.mrb[0].mxu0
        %805 = vmatprep.mubr.bf16.mxu0 0
        %806 = vmatmul.mubr.bf16.gmra.mrb[0].mxu0 %v623
        %v807 = vpop.f32.mrb[0].mxu0
        %v808 = vadd.f32 %v651, %v807
        %v809 = vpop.f32.mrb[0].mxu0
        %v810 = vpop.f32.mrb[0].mxu0
        %v811 = vadd.f32 %v651, %v810
        %v812 = vpop.f32.mrb[0].mxu0
        %813 = vmatprep.mubr.bf16.mxu0 0
        %814 = vmatmul.mubr.bf16.gmra.mrb[0].mxu0 %v624
        %v815 = vpop.f32.mrb[0].mxu0
        %v816 = vadd.f32 %v651, %v815
        %v817 = vpop.f32.mrb[0].mxu0
        %v818 = vpop.f32.mrb[0].mxu0
        %v819 = vadd.f32 %v651, %v818
        %v820 = vpop.f32.mrb[0].mxu0
        %821 = vmatprep.mubr.bf16.mxu0 0
        %822 = vmatmul.mubr.bf16.gmra.mrb[0].mxu0 %v625
        %v823 = vpop.f32.mrb[0].mxu0
        %v824 = vadd.f32 %v651, %v823
        %v825 = vpop.f32.mrb[0].mxu0
        %v826 = vpop.f32.mrb[0].mxu0
        %v827 = vadd.f32 %v651, %v826
        %v828 = vpop.f32.mrb[0].mxu0
        %829 = vmatprep.mubr.bf16.mxu0 0
        %830 = vmatmul.mubr.bf16.gmra.mrb[0].mxu0 %v626
        %v831 = vpop.f32.mrb[0].mxu0
        %v832 = vadd.f32 %v651, %v831
        %v833 = vpop.f32.mrb[0].mxu0
        %v834 = vpop.f32.mrb[0].mxu0
        %v835 = vadd.f32 %v651, %v834
        %v836 = vpop.f32.mrb[0].mxu0
        %837 = vmatprep.mubr.bf16.mxu0 0
        %838 = vmatmul.mubr.bf16.gmra.mrb[0].mxu0 %v627
        %v839 = vpop.f32.mrb[0].mxu0
        %v840 = vadd.f32 %v651, %v839
        %v841 = vpop.f32.mrb[0].mxu0
        %v842 = vpop.f32.mrb[0].mxu0
        %v843 = vadd.f32 %v651, %v842
        %v844 = vpop.f32.mrb[0].mxu0
        %845 = vmatprep.mubr.bf16.mxu0 0
        %846 = vmatmul.mubr.bf16.gmra.mrb[0].mxu0 %v628
        %v847 = vpop.f32.mrb[0].mxu0
        %v848 = vadd.f32 %v651, %v847
        %v849 = vpop.f32.mrb[0].mxu0
        %v850 = vpop.f32.mrb[0].mxu0
        %v851 = vadd.f32 %v651, %v850
        %v852 = vpop.f32.mrb[0].mxu0
        %853 = vmatprep.mubr.bf16.mxu0 0
        %854 = vmatmul.mubr.bf16.gmra.mrb[0].mxu0 %v629
        %v855 = vpop.f32.mrb[0].mxu0
        %v856 = vadd.f32 %v651, %v855
        %v857 = vpop.f32.mrb[0].mxu0
        %v858 = vpop.f32.mrb[0].mxu0
        %v859 = vadd.f32 %v651, %v858
        %v860 = vpop.f32.mrb[0].mxu0
        %861 = vdwg.mxu0
        %v862 = vmax.f32 %v736, 0.0
        %v863 = vmax.f32 %v739, 0.0
        %v864 = vmax.f32 %v744, 0.0
        %v865 = vmax.f32 %v747, 0.0
        %v866 = vmax.f32 %v752, 0.0
        %v867 = vmax.f32 %v755, 0.0
        %v868 = vmax.f32 %v760, 0.0
        %v869 = vmax.f32 %v763, 0.0
        %v870 = vmax.f32 %v768, 0.0
        %v871 = vmax.f32 %v771, 0.0
        %v872 = vmax.f32 %v776, 0.0
        %v873 = vmax.f32 %v779, 0.0
        %v874 = vmax.f32 %v784, 0.0
        %v875 = vmax.f32 %v787, 0.0
        %v876 = vmax.f32 %v792, 0.0
        %v877 = vmax.f32 %v795, 0.0
        %v878 = vmax.f32 %v800, 0.0
        %v879 = vmax.f32 %v803, 0.0
        %v880 = vmax.f32 %v808, 0.0
        %v881 = vmax.f32 %v811, 0.0
        %v882 = vmax.f32 %v816, 0.0
        %v883 = vmax.f32 %v819, 0.0
        %v884 = vmax.f32 %v824, 0.0
        %v885 = vmax.f32 %v827, 0.0
        %v886 = vmax.f32 %v832, 0.0
        %v887 = vmax.f32 %v835, 0.0
        %v888 = vmax.f32 %v840, 0.0
        %v889 = vmax.f32 %v843, 0.0
        %v890 = vmax.f32 %v848, 0.0
        %v891 = vmax.f32 %v851, 0.0
        %v892 = vmax.f32 %v856, 0.0
        %v893 = vmax.f32 %v859, 0.0
        %v894 = vpack.c.bf16 %v863, %v862
        %v895 = vpack.c.bf16 %v865, %v864
        %v896 = vpack.c.bf16 %v867, %v866
        %v897 = vpack.c.bf16 %v869, %v868
        %v898 = vpack.c.bf16 %v871, %v870
        %v899 = vpack.c.bf16 %v873, %v872
        %v900 = vpack.c.bf16 %v875, %v874
        %v901 = vpack.c.bf16 %v877, %v876
        %v902 = vpack.c.bf16 %v879, %v878
        %v903 = vpack.c.bf16 %v881, %v880
        %v904 = vpack.c.bf16 %v883, %v882
        %v905 = vpack.c.bf16 %v885, %v884
        %v906 = vpack.c.bf16 %v887, %v886
        %v907 = vpack.c.bf16 %v889, %v888
        %v908 = vpack.c.bf16 %v891, %v890
        %v909 = vpack.c.bf16 %v893, %v892
        %v910 = vld [vmem:[%s5] sm:$0xf]
        %v911 = vld [vmem:[%s5 + $0x4] sm:$0xf]
        %v912 = vld [vmem:[%s5 + $0x8] sm:$0xf]
        %v913 = vld [vmem:[%s5 + $0xc] sm:$0xf]
        %v914 = vld [vmem:[%s5 + $0x10] sm:$0xf]
        %v915 = vld [vmem:[%s5 + $0x14] sm:$0xf]
        %v916 = vld [vmem:[%s5 + $0x18] sm:$0xf]
        %v917 = vld [vmem:[%s5 + $0x1c] sm:$0xf]
        %v918 = vld [vmem:[%s5 + $0x20] sm:$0xf]
        %v919 = vld [vmem:[%s5 + $0x24] sm:$0xf]
        %v920 = vld [vmem:[%s5 + $0x28] sm:$0xf]
        %v921 = vld [vmem:[%s5 + $0x2c] sm:$0xf]
        %v922 = vld [vmem:[%s5 + $0x30] sm:$0xf]
        %v923 = vld [vmem:[%s5 + $0x34] sm:$0xf]
        %v924 = vld [vmem:[%s5 + $0x38] sm:$0xf]
        %v925 = vld [vmem:[%s5 + $0x3c] sm:$0xf]
        %v926 = vld [vmem:[%s6] sm:$0x1]
        %v928 = vlaneseq
        %v929 = vshrl.u32 %v928, 7
        %v930 = vsub.s32 0, %v929
        %v931 = vrot.slane %v926, %v930
        %v949 = vunpack.c.l.b16 %v910
        %v950 = vunpack.c.l.b16 %v911
        %v951 = vunpack.c.l.b16 %v912
        %v952 = vunpack.c.l.b16 %v913
        %v953 = vunpack.c.l.b16 %v914
        %v954 = vunpack.c.l.b16 %v915
        %v955 = vunpack.c.l.b16 %v916
        %v956 = vunpack.c.l.b16 %v917
        %v957 = vunpack.c.l.b16 %v918
        %v958 = vunpack.c.l.b16 %v919
        %v959 = vunpack.c.l.b16 %v920
        %v960 = vunpack.c.l.b16 %v921
        %v961 = vunpack.c.l.b16 %v922
        %v962 = vunpack.c.l.b16 %v923
        %v963 = vunpack.c.l.b16 %v924
        %v964 = vunpack.c.l.b16 %v925
        %v965 = vpack.c.b16 %v950, %v949
        %v966 = vpack.c.b16 %v952, %v951
        %v967 = vpack.c.b16 %v954, %v953
        %v968 = vpack.c.b16 %v956, %v955
        %v969 = vpack.c.b16 %v958, %v957
        %v970 = vpack.c.b16 %v960, %v959
        %v971 = vpack.c.b16 %v962, %v961
        %v972 = vpack.c.b16 %v964, %v963
        %981 = vmatprep.subr.bf16.mxu0 0
        %982 = vmatpush1.bf16.msra.mxu0 %v965
        %983 = vmatprep.subr.bf16.mxu0 0
        %984 = vmatpush1.bf16.msra.mxu0 %v966
        %985 = vmatprep.subr.bf16.mxu0 0
        %986 = vmatpush1.bf16.msra.mxu0 %v967
        %987 = vmatprep.subr.bf16.mxu0 0
        %988 = vmatpush1.bf16.msra.mxu0 %v968
        %989 = vmatprep.subr.bf16.mxu0 0
        %990 = vmatpush1.bf16.msra.mxu0 %v969
        %991 = vmatprep.subr.bf16.mxu0 0
        %992 = vmatpush1.bf16.msra.mxu0 %v970
        %993 = vmatprep.subr.bf16.mxu0 0
        %994 = vmatpush1.bf16.msra.mxu0 %v971
        %995 = vmatprep.subr.bf16.mxu0 0
        %996 = vmatpush1.bf16.msra.mxu0 %v972
        %997 = vmatprep.subr.bf16.mxu0 0
        %998 = vmatpush1.bf16.msra.mxu0 0
        %999 = vmatprep.subr.bf16.mxu0 0
        %1000 = vmatpush1.bf16.msra.mxu0 0
        %1001 = vmatprep.subr.bf16.mxu0 0
        %1002 = vmatpush1.bf16.msra.mxu0 0
        %1003 = vmatprep.subr.bf16.mxu0 0
        %1004 = vmatpush1.bf16.msra.mxu0 0
        %1005 = vmatprep.subr.bf16.mxu0 0
        %1006 = vmatpush1.bf16.msra.mxu0 0
        %1007 = vmatprep.subr.bf16.mxu0 0
        %1008 = vmatpush1.bf16.msra.mxu0 0
        %1009 = vmatprep.subr.bf16.mxu0 0
        %1010 = vmatpush1.bf16.msra.mxu0 0
        %1011 = vmatprep.subr.bf16.mxu0 0
        %1012 = vmatpush1.bf16.msra.mxu0 0
        %1013 = vmatprep.mubr.bf16.mxu0 0
        %1014 = vmatmul.mubr.bf16.gmra.mrb[0].mxu0 %v894
        %v1015 = vpop.f32.mrb[0].mxu0
        %v1016 = vadd.f32 %v931, %v1015
        %v1017 = vpop.f32.mrb[0].mxu0
        %v1018 = vpop.f32.mrb[0].mxu0
        %v1019 = vadd.f32 %v931, %v1018
        %v1020 = vpop.f32.mrb[0].mxu0
        %1021 = vmatprep.mubr.bf16.mxu0 0
        %1022 = vmatmul.mubr.bf16.gmra.mrb[0].mxu0 %v895
        %v1023 = vpop.f32.mrb[0].mxu0
        %v1024 = vadd.f32 %v931, %v1023
        %v1025 = vpop.f32.mrb[0].mxu0
        %v1026 = vpop.f32.mrb[0].mxu0
        %v1027 = vadd.f32 %v931, %v1026
        %v1028 = vpop.f32.mrb[0].mxu0
        %1029 = vmatprep.mubr.bf16.mxu0 0
        %1030 = vmatmul.mubr.bf16.gmra.mrb[0].mxu0 %v896
        %v1031 = vpop.f32.mrb[0].mxu0
        %v1032 = vadd.f32 %v931, %v1031
        %v1033 = vpop.f32.mrb[0].mxu0
        %v1034 = vpop.f32.mrb[0].mxu0
        %v1035 = vadd.f32 %v931, %v1034
        %v1036 = vpop.f32.mrb[0].mxu0
        %1037 = vmatprep.mubr.bf16.mxu0 0
        %1038 = vmatmul.mubr.bf16.gmra.mrb[0].mxu0 %v897
        %v1039 = vpop.f32.mrb[0].mxu0
        %v1040 = vadd.f32 %v931, %v1039
        %v1041 = vpop.f32.mrb[0].mxu0
        %v1042 = vpop.f32.mrb[0].mxu0
        %v1043 = vadd.f32 %v931, %v1042
        %v1044 = vpop.f32.mrb[0].mxu0
        %1045 = vmatprep.mubr.bf16.mxu0 0
        %1046 = vmatmul.mubr.bf16.gmra.mrb[0].mxu0 %v898
        %v1047 = vpop.f32.mrb[0].mxu0
        %v1048 = vadd.f32 %v931, %v1047
        %v1049 = vpop.f32.mrb[0].mxu0
        %v1050 = vpop.f32.mrb[0].mxu0
        %v1051 = vadd.f32 %v931, %v1050
        %v1052 = vpop.f32.mrb[0].mxu0
        %1053 = vmatprep.mubr.bf16.mxu0 0
        %1054 = vmatmul.mubr.bf16.gmra.mrb[0].mxu0 %v899
        %v1055 = vpop.f32.mrb[0].mxu0
        %v1056 = vadd.f32 %v931, %v1055
        %v1057 = vpop.f32.mrb[0].mxu0
        %v1058 = vpop.f32.mrb[0].mxu0
        %v1059 = vadd.f32 %v931, %v1058
        %v1060 = vpop.f32.mrb[0].mxu0
        %1061 = vmatprep.mubr.bf16.mxu0 0
        %1062 = vmatmul.mubr.bf16.gmra.mrb[0].mxu0 %v900
        %v1063 = vpop.f32.mrb[0].mxu0
        %v1064 = vadd.f32 %v931, %v1063
        %v1065 = vpop.f32.mrb[0].mxu0
        %v1066 = vpop.f32.mrb[0].mxu0
        %v1067 = vadd.f32 %v931, %v1066
        %v1068 = vpop.f32.mrb[0].mxu0
        %1069 = vmatprep.mubr.bf16.mxu0 0
        %1070 = vmatmul.mubr.bf16.gmra.mrb[0].mxu0 %v901
        %v1071 = vpop.f32.mrb[0].mxu0
        %v1072 = vadd.f32 %v931, %v1071
        %v1073 = vpop.f32.mrb[0].mxu0
        %v1074 = vpop.f32.mrb[0].mxu0
        %v1075 = vadd.f32 %v931, %v1074
        %v1076 = vpop.f32.mrb[0].mxu0
        %1077 = vmatprep.mubr.bf16.mxu0 0
        %1078 = vmatmul.mubr.bf16.gmra.mrb[0].mxu0 %v902
        %v1079 = vpop.f32.mrb[0].mxu0
        %v1080 = vadd.f32 %v931, %v1079
        %v1081 = vpop.f32.mrb[0].mxu0
        %v1082 = vpop.f32.mrb[0].mxu0
        %v1083 = vadd.f32 %v931, %v1082
        %v1084 = vpop.f32.mrb[0].mxu0
        %1085 = vmatprep.mubr.bf16.mxu0 0
        %1086 = vmatmul.mubr.bf16.gmra.mrb[0].mxu0 %v903
        %v1087 = vpop.f32.mrb[0].mxu0
        %v1088 = vadd.f32 %v931, %v1087
        %v1089 = vpop.f32.mrb[0].mxu0
        %v1090 = vpop.f32.mrb[0].mxu0
        %v1091 = vadd.f32 %v931, %v1090
        %v1092 = vpop.f32.mrb[0].mxu0
        %1093 = vmatprep.mubr.bf16.mxu0 0
        %1094 = vmatmul.mubr.bf16.gmra.mrb[0].mxu0 %v904
        %v1095 = vpop.f32.mrb[0].mxu0
        %v1096 = vadd.f32 %v931, %v1095
        %v1097 = vpop.f32.mrb[0].mxu0
        %v1098 = vpop.f32.mrb[0].mxu0
        %v1099 = vadd.f32 %v931, %v1098
        %v1100 = vpop.f32.mrb[0].mxu0
        %1101 = vmatprep.mubr.bf16.mxu0 0
        %1102 = vmatmul.mubr.bf16.gmra.mrb[0].mxu0 %v905
        %v1103 = vpop.f32.mrb[0].mxu0
        %v1104 = vadd.f32 %v931, %v1103
        %v1105 = vpop.f32.mrb[0].mxu0
        %v1106 = vpop.f32.mrb[0].mxu0
        %v1107 = vadd.f32 %v931, %v1106
        %v1108 = vpop.f32.mrb[0].mxu0
        %1109 = vmatprep.mubr.bf16.mxu0 0
        %1110 = vmatmul.mubr.bf16.gmra.mrb[0].mxu0 %v906
        %v1111 = vpop.f32.mrb[0].mxu0
        %v1112 = vadd.f32 %v931, %v1111
        %v1113 = vpop.f32.mrb[0].mxu0
        %v1114 = vpop.f32.mrb[0].mxu0
        %v1115 = vadd.f32 %v931, %v1114
        %v1116 = vpop.f32.mrb[0].mxu0
        %1117 = vmatprep.mubr.bf16.mxu0 0
        %1118 = vmatmul.mubr.bf16.gmra.mrb[0].mxu0 %v907
        %v1119 = vpop.f32.mrb[0].mxu0
        %v1120 = vadd.f32 %v931, %v1119
        %v1121 = vpop.f32.mrb[0].mxu0
        %v1122 = vpop.f32.mrb[0].mxu0
        %v1123 = vadd.f32 %v931, %v1122
        %v1124 = vpop.f32.mrb[0].mxu0
        %1125 = vmatprep.mubr.bf16.mxu0 0
        %1126 = vmatmul.mubr.bf16.gmra.mrb[0].mxu0 %v908
        %v1127 = vpop.f32.mrb[0].mxu0
        %v1128 = vadd.f32 %v931, %v1127
        %v1129 = vpop.f32.mrb[0].mxu0
        %v1130 = vpop.f32.mrb[0].mxu0
        %v1131 = vadd.f32 %v931, %v1130
        %v1132 = vpop.f32.mrb[0].mxu0
        %1133 = vmatprep.mubr.bf16.mxu0 0
        %1134 = vmatmul.mubr.bf16.gmra.mrb[0].mxu0 %v909
        %v1135 = vpop.f32.mrb[0].mxu0
        %v1136 = vadd.f32 %v931, %v1135
        %v1137 = vpop.f32.mrb[0].mxu0
        %v1138 = vpop.f32.mrb[0].mxu0
        %v1139 = vadd.f32 %v931, %v1138
        %v1140 = vpop.f32.mrb[0].mxu0
        %1141 = vdwg.mxu0
        %v1142 = vxor.u32 %v1016, 2147483648
        %v1143 = vxor.u32 %v1019, 2147483648
        %v1144 = vxor.u32 %v1024, 2147483648
        %v1145 = vxor.u32 %v1027, 2147483648
        %v1146 = vxor.u32 %v1032, 2147483648
        %v1147 = vxor.u32 %v1035, 2147483648
        %v1148 = vxor.u32 %v1040, 2147483648
        %v1149 = vxor.u32 %v1043, 2147483648
        %v1150 = vxor.u32 %v1048, 2147483648
        %v1151 = vxor.u32 %v1051, 2147483648
        %v1152 = vxor.u32 %v1056, 2147483648
        %v1153 = vxor.u32 %v1059, 2147483648
        %v1154 = vxor.u32 %v1064, 2147483648
        %v1155 = vxor.u32 %v1067, 2147483648
        %v1156 = vxor.u32 %v1072, 2147483648
        %v1157 = vxor.u32 %v1075, 2147483648
        %v1158 = vxor.u32 %v1080, 2147483648
        %v1159 = vxor.u32 %v1083, 2147483648
        %v1160 = vxor.u32 %v1088, 2147483648
        %v1161 = vxor.u32 %v1091, 2147483648
        %v1162 = vxor.u32 %v1096, 2147483648
        %v1163 = vxor.u32 %v1099, 2147483648
        %v1164 = vxor.u32 %v1104, 2147483648
        %v1165 = vxor.u32 %v1107, 2147483648
        %v1166 = vxor.u32 %v1112, 2147483648
        %v1167 = vxor.u32 %v1115, 2147483648
        %v1168 = vxor.u32 %v1120, 2147483648
        %v1169 = vxor.u32 %v1123, 2147483648
        %v1170 = vxor.u32 %v1128, 2147483648
        %v1171 = vxor.u32 %v1131, 2147483648
        %v1172 = vxor.u32 %v1136, 2147483648
        %v1173 = vxor.u32 %v1139, 2147483648
        %v1174 = vmul.f32 %v1142, 1.442695
        %v1175 = vpow.pop %v1174
        %v1176 = vmul.f32 %v1143, 1.442695
        %v1177 = vpow.pop %v1176
        %v1178 = vmul.f32 %v1144, 1.442695
        %v1179 = vpow.pop %v1178
        %v1180 = vmul.f32 %v1145, 1.442695
        %v1181 = vpow.pop %v1180
        %v1182 = vmul.f32 %v1146, 1.442695
        %v1183 = vpow.pop %v1182
        %v1184 = vmul.f32 %v1147, 1.442695
        %v1185 = vpow.pop %v1184
        %v1186 = vmul.f32 %v1148, 1.442695
        %v1187 = vpow.pop %v1186
        %v1188 = vmul.f32 %v1149, 1.442695
        %v1189 = vpow.pop %v1188
        %v1190 = vmul.f32 %v1150, 1.442695
        %v1191 = vpow.pop %v1190
        %v1192 = vmul.f32 %v1151, 1.442695
        %v1193 = vpow.pop %v1192
        %v1194 = vmul.f32 %v1152, 1.442695
        %v1195 = vpow.pop %v1194
        %v1196 = vmul.f32 %v1153, 1.442695
        %v1197 = vpow.pop %v1196
        %v1198 = vmul.f32 %v1154, 1.442695
        %v1199 = vpow.pop %v1198
        %v1200 = vmul.f32 %v1155, 1.442695
        %v1201 = vpow.pop %v1200
        %v1202 = vmul.f32 %v1156, 1.442695
        %v1203 = vpow.pop %v1202
        %v1204 = vmul.f32 %v1157, 1.442695
        %v1205 = vpow.pop %v1204
        %v1206 = vmul.f32 %v1158, 1.442695
        %v1207 = vpow.pop %v1206
        %v1208 = vmul.f32 %v1159, 1.442695
        %v1209 = vpow.pop %v1208
        %v1210 = vmul.f32 %v1160, 1.442695
        %v1211 = vpow.pop %v1210
        %v1212 = vmul.f32 %v1161, 1.442695
        %v1213 = vpow.pop %v1212
        %v1214 = vmul.f32 %v1162, 1.442695
        %v1215 = vpow.pop %v1214
        %v1216 = vmul.f32 %v1163, 1.442695
        %v1217 = vpow.pop %v1216
        %v1218 = vmul.f32 %v1164, 1.442695
        %v1219 = vpow.pop %v1218
        %v1220 = vmul.f32 %v1165, 1.442695
        %v1221 = vpow.pop %v1220
        %v1222 = vmul.f32 %v1166, 1.442695
        %v1223 = vpow.pop %v1222
        %v1224 = vmul.f32 %v1167, 1.442695
        %v1225 = vpow.pop %v1224
        %v1226 = vmul.f32 %v1168, 1.442695
        %v1227 = vpow.pop %v1226
        %v1228 = vmul.f32 %v1169, 1.442695
        %v1229 = vpow.pop %v1228
        %v1230 = vmul.f32 %v1170, 1.442695
        %v1231 = vpow.pop %v1230
        %v1232 = vmul.f32 %v1171, 1.442695
        %v1233 = vpow.pop %v1232
        %v1234 = vmul.f32 %v1172, 1.442695
        %v1235 = vpow.pop %v1234
        %v1236 = vmul.f32 %v1173, 1.442695
        %v1237 = vpow.pop %v1236
        %v1238 = vadd.f32 %v1175, 1.0
        %v1239 = vadd.f32 %v1177, 1.0
        %v1240 = vadd.f32 %v1179, 1.0
        %v1241 = vadd.f32 %v1181, 1.0
        %v1242 = vadd.f32 %v1183, 1.0
        %v1243 = vadd.f32 %v1185, 1.0
        %v1244 = vadd.f32 %v1187, 1.0
        %v1245 = vadd.f32 %v1189, 1.0
        %v1246 = vadd.f32 %v1191, 1.0
        %v1247 = vadd.f32 %v1193, 1.0
        %v1248 = vadd.f32 %v1195, 1.0
        %v1249 = vadd.f32 %v1197, 1.0
        %v1250 = vadd.f32 %v1199, 1.0
        %v1251 = vadd.f32 %v1201, 1.0
        %v1252 = vadd.f32 %v1203, 1.0
        %v1253 = vadd.f32 %v1205, 1.0
        %v1254 = vadd.f32 %v1207, 1.0
        %v1255 = vadd.f32 %v1209, 1.0
        %v1256 = vadd.f32 %v1211, 1.0
        %v1257 = vadd.f32 %v1213, 1.0
        %v1258 = vadd.f32 %v1215, 1.0
        %v1259 = vadd.f32 %v1217, 1.0
        %v1260 = vadd.f32 %v1219, 1.0
        %v1261 = vadd.f32 %v1221, 1.0
        %v1262 = vadd.f32 %v1223, 1.0
        %v1263 = vadd.f32 %v1225, 1.0
        %v1264 = vadd.f32 %v1227, 1.0
        %v1265 = vadd.f32 %v1229, 1.0
        %v1266 = vadd.f32 %v1231, 1.0
        %v1267 = vadd.f32 %v1233, 1.0
        %v1268 = vadd.f32 %v1235, 1.0
        %v1269 = vadd.f32 %v1237, 1.0
        %v1270 = vrcp.pop %v1238
        %v1271 = vmul.f32 1.0, %v1270
        %v1272 = vrcp.pop %v1239
        %v1273 = vmul.f32 1.0, %v1272
        %v1274 = vrcp.pop %v1240
        %v1275 = vmul.f32 1.0, %v1274
        %v1276 = vrcp.pop %v1241
        %v1277 = vmul.f32 1.0, %v1276
        %v1278 = vrcp.pop %v1242
        %v1279 = vmul.f32 1.0, %v1278
        %v1280 = vrcp.pop %v1243
        %v1281 = vmul.f32 1.0, %v1280
        %v1282 = vrcp.pop %v1244
        %v1283 = vmul.f32 1.0, %v1282
        %v1284 = vrcp.pop %v1245
        %v1285 = vmul.f32 1.0, %v1284
        %v1286 = vrcp.pop %v1246
        %v1287 = vmul.f32 1.0, %v1286
        %v1288 = vrcp.pop %v1247
        %v1289 = vmul.f32 1.0, %v1288
        %v1290 = vrcp.pop %v1248
        %v1291 = vmul.f32 1.0, %v1290
        %v1292 = vrcp.pop %v1249
        %v1293 = vmul.f32 1.0, %v1292
        %v1294 = vrcp.pop %v1250
        %v1295 = vmul.f32 1.0, %v1294
        %v1296 = vrcp.pop %v1251
        %v1297 = vmul.f32 1.0, %v1296
        %v1298 = vrcp.pop %v1252
        %v1299 = vmul.f32 1.0, %v1298
        %v1300 = vrcp.pop %v1253
        %v1301 = vmul.f32 1.0, %v1300
        %v1302 = vrcp.pop %v1254
        %v1303 = vmul.f32 1.0, %v1302
        %v1304 = vrcp.pop %v1255
        %v1305 = vmul.f32 1.0, %v1304
        %v1306 = vrcp.pop %v1256
        %v1307 = vmul.f32 1.0, %v1306
        %v1308 = vrcp.pop %v1257
        %v1309 = vmul.f32 1.0, %v1308
        %v1310 = vrcp.pop %v1258
        %v1311 = vmul.f32 1.0, %v1310
        %v1312 = vrcp.pop %v1259
        %v1313 = vmul.f32 1.0, %v1312
        %v1314 = vrcp.pop %v1260
        %v1315 = vmul.f32 1.0, %v1314
        %v1316 = vrcp.pop %v1261
        %v1317 = vmul.f32 1.0, %v1316
        %v1318 = vrcp.pop %v1262
        %v1319 = vmul.f32 1.0, %v1318
        %v1320 = vrcp.pop %v1263
        %v1321 = vmul.f32 1.0, %v1320
        %v1322 = vrcp.pop %v1264
        %v1323 = vmul.f32 1.0, %v1322
        %v1324 = vrcp.pop %v1265
        %v1325 = vmul.f32 1.0, %v1324
        %v1326 = vrcp.pop %v1266
        %v1327 = vmul.f32 1.0, %v1326
        %v1328 = vrcp.pop %v1267
        %v1329 = vmul.f32 1.0, %v1328
        %v1330 = vrcp.pop %v1268
        %v1331 = vmul.f32 1.0, %v1330
        %v1332 = vrcp.pop %v1269
        %v1333 = vmul.f32 1.0, %v1332
        %vm1334 = vcmask 130048
        %1335 = vst.msk [vmem:[%s280] sm:$0xff] %vm1334, %v1271
        %1336 = vst.msk [vmem:[%s280 + $0x8] sm:$0xff] %vm1334, %v1273
        %1337 = vst.msk [vmem:[%s280 + $0x10] sm:$0xff] %vm1334, %v1275
        %1338 = vst.msk [vmem:[%s280 + $0x18] sm:$0xff] %vm1334, %v1277
        %1339 = vst.msk [vmem:[%s280 + $0x20] sm:$0xff] %vm1334, %v1279
        %1340 = vst.msk [vmem:[%s280 + $0x28] sm:$0xff] %vm1334, %v1281
        %1341 = vst.msk [vmem:[%s280 + $0x30] sm:$0xff] %vm1334, %v1283
        %1342 = vst.msk [vmem:[%s280 + $0x38] sm:$0xff] %vm1334, %v1285
        %1343 = vst.msk [vmem:[%s280 + $0x40] sm:$0xff] %vm1334, %v1287
        %1344 = vst.msk [vmem:[%s280 + $0x48] sm:$0xff] %vm1334, %v1289
        %1345 = vst.msk [vmem:[%s280 + $0x50] sm:$0xff] %vm1334, %v1291
        %1346 = vst.msk [vmem:[%s280 + $0x58] sm:$0xff] %vm1334, %v1293
        %1347 = vst.msk [vmem:[%s280 + $0x60] sm:$0xff] %vm1334, %v1295
        %1348 = vst.msk [vmem:[%s280 + $0x68] sm:$0xff] %vm1334, %v1297
        %1349 = vst.msk [vmem:[%s280 + $0x70] sm:$0xff] %vm1334, %v1299
        %1350 = vst.msk [vmem:[%s280 + $0x78] sm:$0xff] %vm1334, %v1301
        %1351 = vst.msk [vmem:[%s280 + $0x80] sm:$0xff] %vm1334, %v1303
        %1352 = vst.msk [vmem:[%s280 + $0x88] sm:$0xff] %vm1334, %v1305
        %1353 = vst.msk [vmem:[%s280 + $0x90] sm:$0xff] %vm1334, %v1307
        %1354 = vst.msk [vmem:[%s280 + $0x98] sm:$0xff] %vm1334, %v1309
        %1355 = vst.msk [vmem:[%s280 + $0xa0] sm:$0xff] %vm1334, %v1311
        %1356 = vst.msk [vmem:[%s280 + $0xa8] sm:$0xff] %vm1334, %v1313
        %1357 = vst.msk [vmem:[%s280 + $0xb0] sm:$0xff] %vm1334, %v1315
        %1358 = vst.msk [vmem:[%s280 + $0xb8] sm:$0xff] %vm1334, %v1317
        %1359 = vst.msk [vmem:[%s280 + $0xc0] sm:$0xff] %vm1334, %v1319
        %1360 = vst.msk [vmem:[%s280 + $0xc8] sm:$0xff] %vm1334, %v1321
        %1361 = vst.msk [vmem:[%s280 + $0xd0] sm:$0xff] %vm1334, %v1323
        %1362 = vst.msk [vmem:[%s280 + $0xd8] sm:$0xff] %vm1334, %v1325
        %1363 = vst.msk [vmem:[%s280 + $0xe0] sm:$0xff] %vm1334, %v1327
        %1364 = vst.msk [vmem:[%s280 + $0xe8] sm:$0xff] %vm1334, %v1329
        %1365 = vst.msk [vmem:[%s280 + $0xf0] sm:$0xff] %vm1334, %v1331
        %1366 = vst.msk [vmem:[%s280 + $0xf8] sm:$0xff] %vm1334, %v1333
        %s1367 = sand.u32 %s178, 1
        %s1368 = sand.u32 %s178, 1
        %s1369 = smul.addr %s1368, 256
        %s1370 = scalar_lea.vmem [#allocation2], %s1369
        // Predicated region
        $region49: #{tpu_custom_call.1} parent=47 // pred_check
          %p1371 = pneg %p188
        $region50: #{tpu_custom_call.1} parent=47 // pred_check_branch
          %1373 = sbr.rel (%p1371) target = $region52
        $region51: #{tpu_custom_call.1} parent=47 // pred_region
          %s1374 = smul.u32 32, %s18
          %s1375 = ssub.s32 36, %s1374
          %p1376 = scmp.lt.s32.totalorder %s1375, 32
          %s1377 = scalar_select %p1376, %s1375, 32
          %s1378 = smul.u32 128, %s1377
          %p1379 = scmp.ne.s32.totalorder 0, %s1378
          %s1380 = smul.addr %s1374, 8
          %s1381 = scalar_lea.vmem %s7, %s1380
          // Predicated region
          $region53: #{tpu_custom_call.1} parent=51 // pred_check
            %p1382 = pneg %p1379
          $region54: #{tpu_custom_call.1} parent=51 // pred_check_branch
            %1384 = sbr.rel (%p1382) target = $region56
          $region55: #{tpu_custom_call.1} parent=51 // pred_region
            // Predicated region
            $region57: #{tpu_custom_call.1} parent=55 // pred_check
              _
            $region58: #{tpu_custom_call.1} parent=55 // pred_check_branch
              %1386 = sbr.rel (0) target = $region60
            $region59: #{tpu_custom_call.1} parent=55 // pred_region
              // Predicated region
              $region79: #{tpu_custom_call.1} parent=59 // pred_check
                _
              $region80: #{tpu_custom_call.1} parent=59 // pred_check_branch
                %1497 = sbr.rel (0) target = $region82
              $region81: #{tpu_custom_call.1} parent=59 // pred_region
                %s1498 = sshrl.u32 %s1377, 5
                // While loop
                $region83: #{tpu_custom_call.1} parent=81 // loop_pre_header
                  _
                $region84: #{tpu_custom_call.1} parent=81 // loop_header
                  %s1500 = sphi 0, %s1502
                  %p1501 = scmp.ge.s32.totalorder %s1500, %s1498
                  %s1505 = sphi 0, %s1574
                  %s1506 = sphi %s1370, %s1577
                  %s1507 = sphi %s1381, %s1578
                $region85: #{tpu_custom_call.1} parent=81 // loop_header_branch
                  %1504 = sbr.rel (%p1501) target = $region89
                $region86: #{tpu_custom_call.1} parent=81 // loop_body
                  %v1508 = vld [vmem:[%s1506] sm:$0xff]
                  %1509 = vst [vmem:[%s1507] sm:$0xff] %v1508
                  %v1510 = vld [vmem:[%s1506 + $0x8] sm:$0xff]
                  %1511 = vst [vmem:[%s1507 + $0x8] sm:$0xff] %v1510
                  %v1512 = vld [vmem:[%s1506 + $0x10] sm:$0xff]
                  %1513 = vst [vmem:[%s1507 + $0x10] sm:$0xff] %v1512
                  %v1514 = vld [vmem:[%s1506 + $0x18] sm:$0xff]
                  %1515 = vst [vmem:[%s1507 + $0x18] sm:$0xff] %v1514
                  %v1516 = vld [vmem:[%s1506 + $0x20] sm:$0xff]
                  %1517 = vst [vmem:[%s1507 + $0x20] sm:$0xff] %v1516
                  %v1518 = vld [vmem:[%s1506 + $0x28] sm:$0xff]
                  %1519 = vst [vmem:[%s1507 + $0x28] sm:$0xff] %v1518
                  %v1520 = vld [vmem:[%s1506 + $0x30] sm:$0xff]
                  %1521 = vst [vmem:[%s1507 + $0x30] sm:$0xff] %v1520
                  %v1522 = vld [vmem:[%s1506 + $0x38] sm:$0xff]
                  %1523 = vst [vmem:[%s1507 + $0x38] sm:$0xff] %v1522
                  %v1524 = vld [vmem:[%s1506 + $0x40] sm:$0xff]
                  %1525 = vst [vmem:[%s1507 + $0x40] sm:$0xff] %v1524
                  %v1526 = vld [vmem:[%s1506 + $0x48] sm:$0xff]
                  %1527 = vst [vmem:[%s1507 + $0x48] sm:$0xff] %v1526
                  %v1528 = vld [vmem:[%s1506 + $0x50] sm:$0xff]
                  %1529 = vst [vmem:[%s1507 + $0x50] sm:$0xff] %v1528
                  %v1530 = vld [vmem:[%s1506 + $0x58] sm:$0xff]
                  %1531 = vst [vmem:[%s1507 + $0x58] sm:$0xff] %v1530
                  %v1532 = vld [vmem:[%s1506 + $0x60] sm:$0xff]
                  %1533 = vst [vmem:[%s1507 + $0x60] sm:$0xff] %v1532
                  %v1534 = vld [vmem:[%s1506 + $0x68] sm:$0xff]
                  %1535 = vst [vmem:[%s1507 + $0x68] sm:$0xff] %v1534
                  %v1536 = vld [vmem:[%s1506 + $0x70] sm:$0xff]
                  %1537 = vst [vmem:[%s1507 + $0x70] sm:$0xff] %v1536
                  %v1538 = vld [vmem:[%s1506 + $0x78] sm:$0xff]
                  %1539 = vst [vmem:[%s1507 + $0x78] sm:$0xff] %v1538
                  %v1540 = vld [vmem:[%s1506 + $0x80] sm:$0xff]
                  %1541 = vst [vmem:[%s1507 + $0x80] sm:$0xff] %v1540
                  %v1542 = vld [vmem:[%s1506 + $0x88] sm:$0xff]
                  %1543 = vst [vmem:[%s1507 + $0x88] sm:$0xff] %v1542
                  %v1544 = vld [vmem:[%s1506 + $0x90] sm:$0xff]
                  %1545 = vst [vmem:[%s1507 + $0x90] sm:$0xff] %v1544
                  %v1546 = vld [vmem:[%s1506 + $0x98] sm:$0xff]
                  %1547 = vst [vmem:[%s1507 + $0x98] sm:$0xff] %v1546
                  %v1548 = vld [vmem:[%s1506 + $0xa0] sm:$0xff]
                  %1549 = vst [vmem:[%s1507 + $0xa0] sm:$0xff] %v1548
                  %v1550 = vld [vmem:[%s1506 + $0xa8] sm:$0xff]
                  %1551 = vst [vmem:[%s1507 + $0xa8] sm:$0xff] %v1550
                  %v1552 = vld [vmem:[%s1506 + $0xb0] sm:$0xff]
                  %1553 = vst [vmem:[%s1507 + $0xb0] sm:$0xff] %v1552
                  %v1554 = vld [vmem:[%s1506 + $0xb8] sm:$0xff]
                  %1555 = vst [vmem:[%s1507 + $0xb8] sm:$0xff] %v1554
                  %v1556 = vld [vmem:[%s1506 + $0xc0] sm:$0xff]
                  %1557 = vst [vmem:[%s1507 + $0xc0] sm:$0xff] %v1556
                  %v1558 = vld [vmem:[%s1506 + $0xc8] sm:$0xff]
                  %1559 = vst [vmem:[%s1507 + $0xc8] sm:$0xff] %v1558
                  %v1560 = vld [vmem:[%s1506 + $0xd0] sm:$0xff]
                  %1561 = vst [vmem:[%s1507 + $0xd0] sm:$0xff] %v1560
                  %v1562 = vld [vmem:[%s1506 + $0xd8] sm:$0xff]
                  %1563 = vst [vmem:[%s1507 + $0xd8] sm:$0xff] %v1562
                  %v1564 = vld [vmem:[%s1506 + $0xe0] sm:$0xff]
                  %1565 = vst [vmem:[%s1507 + $0xe0] sm:$0xff] %v1564
                  %v1566 = vld [vmem:[%s1506 + $0xe8] sm:$0xff]
                  %1567 = vst [vmem:[%s1507 + $0xe8] sm:$0xff] %v1566
                  %v1568 = vld [vmem:[%s1506 + $0xf0] sm:$0xff]
                  %1569 = vst [vmem:[%s1507 + $0xf0] sm:$0xff] %v1568
                  %v1570 = vld [vmem:[%s1506 + $0xf8] sm:$0xff]
                  %1571 = vst [vmem:[%s1507 + $0xf8] sm:$0xff] %v1570
                  %s1572 = sadd.s32 1, %s1505
                  %p1573 = scmp.ge.s32.totalorder %s1572, %s1498
                  %s1574 = scalar_select %p1573, 0, %s1572
                  %s1575 = smul.u32 %s1574, 256
                  %s1576 = smul.u32 %s1574, 256
                  %s1577 = scalar_lea.vmem %s1370, %s1575 [#allocation2]
                  %s1578 = scalar_lea.vmem %s1381, %s1576
                $region87: #{tpu_custom_call.1} parent=81 // loop_footer
                  %s1502 = sadd.s32 %s1500, 1
                $region88: #{tpu_custom_call.1} parent=81 // loop_footer_branch
                  %1499 = sbr.rel target = $region84
                $region89: #{tpu_custom_call.1} parent=81 // loop_exit
                  _
                %s1579 = sshrl.u32 %s1377, 5
                %s1580 = sand.u32 %s1377, 31
                %s1581 = smul.u32 %s1579, 32
                %s1582 = smul.u32 8, %s1581
                %s1583 = scalar_lea.vmem %s1370, %s1582 [#allocation2]
                %s1584 = smul.u32 8, %s1581
                %s1585 = scalar_lea.vmem %s1381, %s1584
                // While loop
                $region90: #{tpu_custom_call.1} parent=81 // loop_pre_header
                  _
                $region91: #{tpu_custom_call.1} parent=81 // loop_header
                  %s1587 = sphi 0, %s1589
                  %p1588 = scmp.ge.s32.totalorder %s1587, %s1580
                  %s1592 = sphi 0, %s1599
                  %s1593 = sphi %s1583, %s1602
                  %s1594 = sphi %s1585, %s1603
                $region92: #{tpu_custom_call.1} parent=81 // loop_header_branch
                  %1591 = sbr.rel (%p1588) target = $region96
                $region93: #{tpu_custom_call.1} parent=81 // loop_body
                  %v1595 = vld [vmem:[%s1593] sm:$0xff]
                  %1596 = vst [vmem:[%s1594] sm:$0xff] %v1595
                  %s1597 = sadd.s32 1, %s1592
                  %p1598 = scmp.ge.s32.totalorder %s1597, %s1580
                  %s1599 = scalar_select %p1598, 0, %s1597
                  %s1600 = smul.u32 %s1599, 8
                  %s1601 = smul.u32 %s1599, 8
                  %s1602 = scalar_lea.vmem %s1583, %s1600 [#allocation2]
                  %s1603 = scalar_lea.vmem %s1585, %s1601
                $region94: #{tpu_custom_call.1} parent=81 // loop_footer
                  %s1589 = sadd.s32 %s1587, 1
                $region95: #{tpu_custom_call.1} parent=81 // loop_footer_branch
                  %1586 = sbr.rel target = $region91
                $region96: #{tpu_custom_call.1} parent=81 // loop_exit
                  _
              $region82: #{tpu_custom_call.1} parent=59 // pred_fallthru
                _
              // Predicated region
              $region97: #{tpu_custom_call.1} parent=59 // pred_check
                _
              $region98: #{tpu_custom_call.1} parent=59 // pred_check_branch
                %1605 = sbr.rel target = $region100
              $region99: #{tpu_custom_call.1} parent=59 // pred_region
                _
              $region100: #{tpu_custom_call.1} parent=59 // pred_fallthru
                _
            $region60: #{tpu_custom_call.1} parent=55 // pred_fallthru
              _
            // Predicated region
            $region61: #{tpu_custom_call.1} parent=55 // pred_check
              _
            $region62: #{tpu_custom_call.1} parent=55 // pred_check_branch
              %1388 = sbr.rel target = $region64
            $region63: #{tpu_custom_call.1} parent=55 // pred_region
              %s1390 = sshrl.u32 %s1377, 5
              // While loop
              $region65: #{tpu_custom_call.1} parent=63 // loop_pre_header
                _
              $region66: #{tpu_custom_call.1} parent=63 // loop_header
                %s1392 = sphi 0, %s1394
                %p1393 = scmp.ge.s32.totalorder %s1392, %s1390
                %s1397 = sphi 0, %s1466
                %s1398 = sphi %s1370, %s1469
                %s1399 = sphi %s1381, %s1470
              $region67: #{tpu_custom_call.1} parent=63 // loop_header_branch
                %1396 = sbr.rel (%p1393) target = $region71
              $region68: #{tpu_custom_call.1} parent=63 // loop_body
                %v1400 = vld [vmem:[%s1398] sm:$0xff]
                %1401 = vst [vmem:[%s1399] sm:$0xff] %v1400
                %v1402 = vld [vmem:[%s1398 + $0x8] sm:$0xff]
                %1403 = vst [vmem:[%s1399 + $0x8] sm:$0xff] %v1402
                %v1404 = vld [vmem:[%s1398 + $0x10] sm:$0xff]
                %1405 = vst [vmem:[%s1399 + $0x10] sm:$0xff] %v1404
                %v1406 = vld [vmem:[%s1398 + $0x18] sm:$0xff]
                %1407 = vst [vmem:[%s1399 + $0x18] sm:$0xff] %v1406
                %v1408 = vld [vmem:[%s1398 + $0x20] sm:$0xff]
                %1409 = vst [vmem:[%s1399 + $0x20] sm:$0xff] %v1408
                %v1410 = vld [vmem:[%s1398 + $0x28] sm:$0xff]
                %1411 = vst [vmem:[%s1399 + $0x28] sm:$0xff] %v1410
                %v1412 = vld [vmem:[%s1398 + $0x30] sm:$0xff]
                %1413 = vst [vmem:[%s1399 + $0x30] sm:$0xff] %v1412
                %v1414 = vld [vmem:[%s1398 + $0x38] sm:$0xff]
                %1415 = vst [vmem:[%s1399 + $0x38] sm:$0xff] %v1414
                %v1416 = vld [vmem:[%s1398 + $0x40] sm:$0xff]
                %1417 = vst [vmem:[%s1399 + $0x40] sm:$0xff] %v1416
                %v1418 = vld [vmem:[%s1398 + $0x48] sm:$0xff]
                %1419 = vst [vmem:[%s1399 + $0x48] sm:$0xff] %v1418
                %v1420 = vld [vmem:[%s1398 + $0x50] sm:$0xff]
                %1421 = vst [vmem:[%s1399 + $0x50] sm:$0xff] %v1420
                %v1422 = vld [vmem:[%s1398 + $0x58] sm:$0xff]
                %1423 = vst [vmem:[%s1399 + $0x58] sm:$0xff] %v1422
                %v1424 = vld [vmem:[%s1398 + $0x60] sm:$0xff]
                %1425 = vst [vmem:[%s1399 + $0x60] sm:$0xff] %v1424
                %v1426 = vld [vmem:[%s1398 + $0x68] sm:$0xff]
                %1427 = vst [vmem:[%s1399 + $0x68] sm:$0xff] %v1426
                %v1428 = vld [vmem:[%s1398 + $0x70] sm:$0xff]
                %1429 = vst [vmem:[%s1399 + $0x70] sm:$0xff] %v1428
                %v1430 = vld [vmem:[%s1398 + $0x78] sm:$0xff]
                %1431 = vst [vmem:[%s1399 + $0x78] sm:$0xff] %v1430
                %v1432 = vld [vmem:[%s1398 + $0x80] sm:$0xff]
                %1433 = vst [vmem:[%s1399 + $0x80] sm:$0xff] %v1432
                %v1434 = vld [vmem:[%s1398 + $0x88] sm:$0xff]
                %1435 = vst [vmem:[%s1399 + $0x88] sm:$0xff] %v1434
                %v1436 = vld [vmem:[%s1398 + $0x90] sm:$0xff]
                %1437 = vst [vmem:[%s1399 + $0x90] sm:$0xff] %v1436
                %v1438 = vld [vmem:[%s1398 + $0x98] sm:$0xff]
                %1439 = vst [vmem:[%s1399 + $0x98] sm:$0xff] %v1438
                %v1440 = vld [vmem:[%s1398 + $0xa0] sm:$0xff]
                %1441 = vst [vmem:[%s1399 + $0xa0] sm:$0xff] %v1440
                %v1442 = vld [vmem:[%s1398 + $0xa8] sm:$0xff]
                %1443 = vst [vmem:[%s1399 + $0xa8] sm:$0xff] %v1442
                %v1444 = vld [vmem:[%s1398 + $0xb0] sm:$0xff]
                %1445 = vst [vmem:[%s1399 + $0xb0] sm:$0xff] %v1444
                %v1446 = vld [vmem:[%s1398 + $0xb8] sm:$0xff]
                %1447 = vst [vmem:[%s1399 + $0xb8] sm:$0xff] %v1446
                %v1448 = vld [vmem:[%s1398 + $0xc0] sm:$0xff]
                %1449 = vst [vmem:[%s1399 + $0xc0] sm:$0xff] %v1448
                %v1450 = vld [vmem:[%s1398 + $0xc8] sm:$0xff]
                %1451 = vst [vmem:[%s1399 + $0xc8] sm:$0xff] %v1450
                %v1452 = vld [vmem:[%s1398 + $0xd0] sm:$0xff]
                %1453 = vst [vmem:[%s1399 + $0xd0] sm:$0xff] %v1452
                %v1454 = vld [vmem:[%s1398 + $0xd8] sm:$0xff]
                %1455 = vst [vmem:[%s1399 + $0xd8] sm:$0xff] %v1454
                %v1456 = vld [vmem:[%s1398 + $0xe0] sm:$0xff]
                %1457 = vst [vmem:[%s1399 + $0xe0] sm:$0xff] %v1456
                %v1458 = vld [vmem:[%s1398 + $0xe8] sm:$0xff]
                %1459 = vst [vmem:[%s1399 + $0xe8] sm:$0xff] %v1458
                %v1460 = vld [vmem:[%s1398 + $0xf0] sm:$0xff]
                %1461 = vst [vmem:[%s1399 + $0xf0] sm:$0xff] %v1460
                %v1462 = vld [vmem:[%s1398 + $0xf8] sm:$0xff]
                %1463 = vst [vmem:[%s1399 + $0xf8] sm:$0xff] %v1462
                %s1464 = sadd.s32 1, %s1397
                %p1465 = scmp.ge.s32.totalorder %s1464, %s1390
                %s1466 = scalar_select %p1465, 0, %s1464
                %s1467 = smul.u32 %s1466, 256
                %s1468 = smul.u32 %s1466, 256
                %s1469 = scalar_lea.vmem %s1370, %s1467 [#allocation2]
                %s1470 = scalar_lea.vmem %s1381, %s1468
              $region69: #{tpu_custom_call.1} parent=63 // loop_footer
                %s1394 = sadd.s32 %s1392, 1
              $region70: #{tpu_custom_call.1} parent=63 // loop_footer_branch
                %1391 = sbr.rel target = $region66
              $region71: #{tpu_custom_call.1} parent=63 // loop_exit
                _
              %s1471 = sshrl.u32 %s1377, 5
              %s1472 = sand.u32 %s1377, 31
              %s1473 = smul.u32 %s1471, 32
              %s1474 = smul.u32 8, %s1473
              %s1475 = scalar_lea.vmem %s1370, %s1474 [#allocation2]
              %s1476 = smul.u32 8, %s1473
              %s1477 = scalar_lea.vmem %s1381, %s1476
              // While loop
              $region72: #{tpu_custom_call.1} parent=63 // loop_pre_header
                _
              $region73: #{tpu_custom_call.1} parent=63 // loop_header
                %s1479 = sphi 0, %s1481
                %p1480 = scmp.ge.s32.totalorder %s1479, %s1472
                %s1484 = sphi 0, %s1491
                %s1485 = sphi %s1475, %s1494
                %s1486 = sphi %s1477, %s1495
              $region74: #{tpu_custom_call.1} parent=63 // loop_header_branch
                %1483 = sbr.rel (%p1480) target = $region78
              $region75: #{tpu_custom_call.1} parent=63 // loop_body
                %v1487 = vld [vmem:[%s1485] sm:$0xff]
                %1488 = vst [vmem:[%s1486] sm:$0xff] %v1487
                %s1489 = sadd.s32 1, %s1484
                %p1490 = scmp.ge.s32.totalorder %s1489, %s1472
                %s1491 = scalar_select %p1490, 0, %s1489
                %s1492 = smul.u32 %s1491, 8
                %s1493 = smul.u32 %s1491, 8
                %s1494 = scalar_lea.vmem %s1475, %s1492 [#allocation2]
                %s1495 = scalar_lea.vmem %s1477, %s1493
              $region76: #{tpu_custom_call.1} parent=63 // loop_footer
                %s1481 = sadd.s32 %s1479, 1
              $region77: #{tpu_custom_call.1} parent=63 // loop_footer_branch
                %1478 = sbr.rel target = $region73
              $region78: #{tpu_custom_call.1} parent=63 // loop_exit
                _
            $region64: #{tpu_custom_call.1} parent=55 // pred_fallthru
              _
          $region56: #{tpu_custom_call.1} parent=51 // pred_fallthru
            _
          %1606 = vnop
        $region52: #{tpu_custom_call.1} parent=47 // pred_fallthru
          _
      $region48: #{tpu_custom_call.1} parent=5 // pred_fallthru
        _
      %p1607 = scmp.le.s32.totalorder 2, %s13
      // Predicated region
      $region101: #{tpu_custom_call.1} parent=5 // pred_check
        %p1608 = pneg %p1607
      $region102: #{tpu_custom_call.1} parent=5 // pred_check_branch
        %1610 = sbr.rel (%p1608) target = $region104
      $region103: #{tpu_custom_call.1} parent=5 // pred_region
        %s1611 = ssub.s32 %s13, 2
        // Predicated region
        $region105: #{tpu_custom_call.1} parent=103 // pred_check
          %p1612 = pneg %p194
        $region106: #{tpu_custom_call.1} parent=103 // pred_check_branch
          %1614 = sbr.rel (%p1612) target = $region108
        $region107: #{tpu_custom_call.1} parent=103 // pred_region
          %s1615 = sand.u32 %s179, 1
          %s1616 = sand.u32 %s179, 1
          %s1617 = smul.addr %s1616, 256
          %s1618 = scalar_lea.vmem [#allocation2], %s1617
        $region108: #{tpu_custom_call.1} parent=103 // pred_fallthru
          _
      $region104: #{tpu_custom_call.1} parent=5 // pred_fallthru
        _
    $region6: #{tpu_custom_call.1} parent=1 // loop_footer
      %s17 = sadd.s32 1, %s13
    $region7: #{tpu_custom_call.1} parent=1 // loop_footer_branch
      %12 = sbr.rel target = $region3
    $region8: #{tpu_custom_call.1} parent=1 // loop_exit
      _

</llo_original>
